<compile_context>
chip_gen: v7x
topology: tpu7x:2x2x1
jax: 0.10.0
libtpu: 0.0.40
codegen_flags: <defaults>
</compile_context>

<pallas_src>
import math

import jax
import jax.numpy as jnp
import numpy as np
from jax import lax
from jax.experimental import pallas as pl
from jax.experimental.pallas import tpu as pltpu

KH = KW = 3  # fixed 3x3 kernel (kernel=3, stride=1, padding=1 in the module)


def resblock_kernel(x_ref, w1_ref, b1_ref, w2_ref, b2_ref, out_ref):
    """One image per grid step. x_ref/out_ref: (1,H,W,C); w*: (9C,C); b*: (1,C)."""
    _, H, W, C = x_ref.shape
    x = x_ref[0]                      # (H, W, C) f32 — single HBM read, reused
    cdt = w1_ref.dtype                # matmul operand dtype (f32 or bf16)

    def conv3x3(inp, w_ref, b_ref):
        # In-register zero halo (no padded HBM copy, no scratch zero-fill).
        zcol = jnp.zeros((H, 1, C), inp.dtype)
        zrow = jnp.zeros((1, W + 2, C), inp.dtype)
        xp = jnp.concatenate([zcol, inp, zcol], axis=1)    # (H,   W+2, C)
        xp = jnp.concatenate([zrow, xp, zrow], axis=0)     # (H+2, W+2, C)
        # im2col: 9 shifted taps concatenated along K -> one MXU matmul.
        taps = [xp[kh:kh + H, kw:kw + W, :]
                for kh in range(KH) for kw in range(KW)]
        patches = jnp.concatenate(taps, axis=-1)           # (H, W, 9C)
        patches = patches.reshape(H * W, KH * KW * C)      # (H*W, 9C)
        y = jnp.dot(patches.astype(cdt), w_ref[...],
                    preferred_element_type=jnp.float32)    # (H*W, C) f32
        return y.reshape(H, W, C) + b_ref[0]               # fused bias

    h = jnp.maximum(conv3x3(x, w1_ref, b1_ref), 0.0)        # conv1 + ReLU
    y = conv3x3(h, w2_ref, b2_ref)                          # conv2 + bias
    out_ref[0] = (y + x).astype(out_ref.dtype)              # + residual


def resnet_block(x_nchw, w1, b1, w2, b2, *, compute_dtype=jnp.float32):
    """x_nchw: (N,C,H,W) f32; w*: (C,C,3,3) PyTorch OIHW; b*: (C,)."""
    x = jnp.transpose(x_nchw, (0, 2, 3, 1)).astype(jnp.float32)   # -> NHWC
    N, H, W, C = x.shape

    # OIHW -> (kh, kw, C_in, C_out) -> (9*C_in, C_out); cast for MXU operands.
    w1_flat = jnp.transpose(w1, (2, 3, 1, 0)).reshape(KH * KW * C, C)
    w2_flat = jnp.transpose(w2, (2, 3, 1, 0)).reshape(KH * KW * C, C)
    w1_flat = w1_flat.astype(compute_dtype)
    w2_flat = w2_flat.astype(compute_dtype)
    b1_r = b1.reshape(1, C).astype(jnp.float32)
    b2_r = b2.reshape(1, C).astype(jnp.float32)

    out = pl.pallas_call(
        resblock_kernel,
        out_shape=jax.ShapeDtypeStruct((N, H, W, C), jnp.float32),
        grid=(N,),
        in_specs=[
            pl.BlockSpec((1, H, W, C), lambda n: (n, 0, 0, 0)),     # activation
            pl.BlockSpec((KH * KW * C, C), lambda n: (0, 0)),       # w1 (resident)
            pl.BlockSpec((1, C), lambda n: (0, 0)),                 # b1
            pl.BlockSpec((KH * KW * C, C), lambda n: (0, 0)),       # w2 (resident)
            pl.BlockSpec((1, C), lambda n: (0, 0)),                 # b2
        ],
        out_specs=pl.BlockSpec((1, H, W, C), lambda n: (n, 0, 0, 0)),
        compiler_params=pltpu.CompilerParams(
            dimension_semantics=("parallel",)),                     # v7x: 2 TCs
    )(x, w1_flat, b1_r, w2_flat, b2_r)

    return jnp.transpose(out, (0, 3, 1, 2))                         # -> NCHW


def _reference(x_nchw, w1, b1, w2, b2):
    dn = ("NCHW", "OIHW", "NCHW")
    h = lax.conv_general_dilated(x_nchw, w1, (1, 1), ((1, 1), (1, 1)),
                                 dimension_numbers=dn)
    h = jnp.maximum(h + b1[None, :, None, None], 0.0)
    y = lax.conv_general_dilated(h, w2, (1, 1), ((1, 1), (1, 1)),
                                 dimension_numbers=dn)
    return y + b2[None, :, None, None] + x_nchw


if __name__ == "__main__":
    N, C, H, W = 2, 4, 16, 16
    key = jax.random.PRNGKey(0)
    kx, kw1, kb1, kw2, kb2 = jax.random.split(key, 5)

    x = jax.random.normal(kx, (N, C, H, W), dtype=jnp.float32)

    # Deterministic PyTorch-style uniform init: U(-1/sqrt(fan_in), 1/sqrt(fan_in))
    fan_in = C * KH * KW
    bound = 1.0 / math.sqrt(fan_in)
    w1 = jax.random.uniform(kw1, (C, C, KH, KW), jnp.float32, -bound, bound)
    b1 = jax.random.uniform(kb1, (C,), jnp.float32, -bound, bound)
    w2 = jax.random.uniform(kw2, (C, C, KH, KW), jnp.float32, -bound, bound)
    b2 = jax.random.uniform(kb2, (C,), jnp.float32, -bound, bound)

    ref = jax.block_until_ready(_reference(x, w1, b1, w2, b2))

    # f32 matmul operands: tight tolerance against the XLA conv reference.
    out = jax.block_until_ready(resnet_block(x, w1, b1, w2, b2))
    assert out.shape == (N, C, H, W)
    assert np.allclose(np.asarray(out), np.asarray(ref), atol=1e-4, rtol=1e-4)

    # bf16 matmul operands (v6e/v7x fast path), f32 accumulation: loose check.
    out_bf16 = jax.block_until_ready(
        resnet_block(x, w1, b1, w2, b2, compute_dtype=jnp.bfloat16))
    assert np.allclose(np.asarray(out_bf16), np.asarray(ref), atol=1e-1, rtol=1e-1)

    print("KERNEL_OK")
</pallas_src>

<mosaic_0001>
module attributes {stable_mosaic.version = 11 : i64} {
  func.func @resblock_kernel(%arg0: i32, %arg1: memref<1x16x16x4xf32, #tpu.memory_space<vmem>>, %arg2: memref<36x4xf32, #tpu.memory_space<vmem>>, %arg3: memref<1x4xf32, #tpu.memory_space<vmem>>, %arg4: memref<36x4xf32, #tpu.memory_space<vmem>>, %arg5: memref<1x4xf32, #tpu.memory_space<vmem>>, %arg6: memref<1x16x16x4xf32, #tpu.memory_space<vmem>>) attributes {dimension_semantics = [#tpu.dimension_semantics<parallel>], iteration_bounds = array<i64: 2>, scalar_prefetch = 0 : i64, scratch_operands = 0 : i64, tpu.core_type = #tpu.core_type<tc>, window_params = [{transform_indices = @transform_0, window_bounds = array<i64: 1, 16, 16, 4>}, {pipeline_mode = #tpu.pipeline_mode<synchronous>, transform_indices = @transform_1, window_bounds = array<i64: 36, 4>}, {pipeline_mode = #tpu.pipeline_mode<synchronous>, transform_indices = @transform_2, window_bounds = array<i64: 1, 4>}, {pipeline_mode = #tpu.pipeline_mode<synchronous>, transform_indices = @transform_3, window_bounds = array<i64: 36, 4>}, {pipeline_mode = #tpu.pipeline_mode<synchronous>, transform_indices = @transform_4, window_bounds = array<i64: 1, 4>}, {transform_indices = @transform_5, window_bounds = array<i64: 1, 16, 16, 4>}]} {
    %c0 = arith.constant 0 : index
    %c0_0 = arith.constant 0 : index
    %c0_1 = arith.constant 0 : index
    %c0_2 = arith.constant 0 : index
    %0 = vector.load %arg1[%c0, %c0_0, %c0_1, %c0_2] : memref<1x16x16x4xf32, #tpu.memory_space<vmem>>, vector<1x16x16x4xf32>
    %1 = vector.shape_cast %0 : vector<1x16x16x4xf32> to vector<16x16x4xf32>
    %cst = arith.constant 0.000000e+00 : f32
    %2 = vector.broadcast %cst : f32 to vector<16x1x4xf32>
    %cst_3 = arith.constant 0.000000e+00 : f32
    %3 = vector.broadcast %cst_3 : f32 to vector<1x18x4xf32>
    %4 = tpu.concatenate %2, %1, %2 in 1 : vector<16x1x4xf32>, vector<16x16x4xf32>, vector<16x1x4xf32> -> vector<16x18x4xf32>
    %5 = tpu.concatenate %3, %4, %3 in 0 : vector<1x18x4xf32>, vector<16x18x4xf32>, vector<1x18x4xf32> -> vector<18x18x4xf32>
    %6 = vector.extract_strided_slice %5 {offsets = [0, 0, 0], sizes = [16, 16, 4], strides = [1, 1, 1]} : vector<18x18x4xf32> to vector<16x16x4xf32>
    %7 = vector.extract_strided_slice %5 {offsets = [0, 1, 0], sizes = [16, 16, 4], strides = [1, 1, 1]} : vector<18x18x4xf32> to vector<16x16x4xf32>
    %8 = vector.extract_strided_slice %5 {offsets = [0, 2, 0], sizes = [16, 16, 4], strides = [1, 1, 1]} : vector<18x18x4xf32> to vector<16x16x4xf32>
    %9 = vector.extract_strided_slice %5 {offsets = [1, 0, 0], sizes = [16, 16, 4], strides = [1, 1, 1]} : vector<18x18x4xf32> to vector<16x16x4xf32>
    %10 = vector.extract_strided_slice %5 {offsets = [1, 1, 0], sizes = [16, 16, 4], strides = [1, 1, 1]} : vector<18x18x4xf32> to vector<16x16x4xf32>
    %11 = vector.extract_strided_slice %5 {offsets = [1, 2, 0], sizes = [16, 16, 4], strides = [1, 1, 1]} : vector<18x18x4xf32> to vector<16x16x4xf32>
    %12 = vector.extract_strided_slice %5 {offsets = [2, 0, 0], sizes = [16, 16, 4], strides = [1, 1, 1]} : vector<18x18x4xf32> to vector<16x16x4xf32>
    %13 = vector.extract_strided_slice %5 {offsets = [2, 1, 0], sizes = [16, 16, 4], strides = [1, 1, 1]} : vector<18x18x4xf32> to vector<16x16x4xf32>
    %14 = vector.extract_strided_slice %5 {offsets = [2, 2, 0], sizes = [16, 16, 4], strides = [1, 1, 1]} : vector<18x18x4xf32> to vector<16x16x4xf32>
    %15 = tpu.concatenate %6, %7, %8, %9, %10, %11, %12, %13, %14 in 2 : vector<16x16x4xf32>, vector<16x16x4xf32>, vector<16x16x4xf32>, vector<16x16x4xf32>, vector<16x16x4xf32>, vector<16x16x4xf32>, vector<16x16x4xf32>, vector<16x16x4xf32>, vector<16x16x4xf32> -> vector<16x16x36xf32>
    %16 = vector.shape_cast %15 : vector<16x16x36xf32> to vector<256x36xf32>
    %c0_4 = arith.constant 0 : index
    %c0_5 = arith.constant 0 : index
    %17 = vector.load %arg2[%c0_4, %c0_5] : memref<36x4xf32, #tpu.memory_space<vmem>>, vector<36x4xf32>
    %cst_6 = arith.constant dense<0.000000e+00> : vector<256x4xf32>
    %18 = tpu.matmul %16, %17, %cst_6 {dimension_numbers = #tpu.dot_dimension_numbers<[1], [0], [0], [1], [0, 0, 1, 1], [], []>} : vector<256x36xf32>, vector<36x4xf32>, vector<256x4xf32> -> vector<256x4xf32>
    %19 = vector.shape_cast %18 : vector<256x4xf32> to vector<16x16x4xf32>
    %c0_7 = arith.constant 0 : index
    %c0_8 = arith.constant 0 : index
    %20 = vector.load %arg3[%c0_7, %c0_8] : memref<1x4xf32, #tpu.memory_space<vmem>>, vector<1x4xf32>
    %21 = vector.shape_cast %20 : vector<1x4xf32> to vector<4xf32>
    %22 = vector.shape_cast %21 : vector<4xf32> to vector<1x1x4xf32>
    %23 = vector.broadcast %22 : vector<1x1x4xf32> to vector<16x16x4xf32>
    %24 = arith.addf %19, %23 : vector<16x16x4xf32>
    %cst_9 = arith.constant 0.000000e+00 : f32
    %25 = vector.broadcast %cst_9 : f32 to vector<16x16x4xf32>
    %26 = arith.maximumf %24, %25 : vector<16x16x4xf32>
    %cst_10 = arith.constant 0.000000e+00 : f32
    %27 = vector.broadcast %cst_10 : f32 to vector<16x1x4xf32>
    %cst_11 = arith.constant 0.000000e+00 : f32
    %28 = vector.broadcast %cst_11 : f32 to vector<1x18x4xf32>
    %29 = tpu.concatenate %27, %26, %27 in 1 : vector<16x1x4xf32>, vector<16x16x4xf32>, vector<16x1x4xf32> -> vector<16x18x4xf32>
    %30 = tpu.concatenate %28, %29, %28 in 0 : vector<1x18x4xf32>, vector<16x18x4xf32>, vector<1x18x4xf32> -> vector<18x18x4xf32>
    %31 = vector.extract_strided_slice %30 {offsets = [0, 0, 0], sizes = [16, 16, 4], strides = [1, 1, 1]} : vector<18x18x4xf32> to vector<16x16x4xf32>
    %32 = vector.extract_strided_slice %30 {offsets = [0, 1, 0], sizes = [16, 16, 4], strides = [1, 1, 1]} : vector<18x18x4xf32> to vector<16x16x4xf32>
    %33 = vector.extract_strided_slice %30 {offsets = [0, 2, 0], sizes = [16, 16, 4], strides = [1, 1, 1]} : vector<18x18x4xf32> to vector<16x16x4xf32>
    %34 = vector.extract_strided_slice %30 {offsets = [1, 0, 0], sizes = [16, 16, 4], strides = [1, 1, 1]} : vector<18x18x4xf32> to vector<16x16x4xf32>
    %35 = vector.extract_strided_slice %30 {offsets = [1, 1, 0], sizes = [16, 16, 4], strides = [1, 1, 1]} : vector<18x18x4xf32> to vector<16x16x4xf32>
    %36 = vector.extract_strided_slice %30 {offsets = [1, 2, 0], sizes = [16, 16, 4], strides = [1, 1, 1]} : vector<18x18x4xf32> to vector<16x16x4xf32>
    %37 = vector.extract_strided_slice %30 {offsets = [2, 0, 0], sizes = [16, 16, 4], strides = [1, 1, 1]} : vector<18x18x4xf32> to vector<16x16x4xf32>
    %38 = vector.extract_strided_slice %30 {offsets = [2, 1, 0], sizes = [16, 16, 4], strides = [1, 1, 1]} : vector<18x18x4xf32> to vector<16x16x4xf32>
    %39 = vector.extract_strided_slice %30 {offsets = [2, 2, 0], sizes = [16, 16, 4], strides = [1, 1, 1]} : vector<18x18x4xf32> to vector<16x16x4xf32>
    %40 = tpu.concatenate %31, %32, %33, %34, %35, %36, %37, %38, %39 in 2 : vector<16x16x4xf32>, vector<16x16x4xf32>, vector<16x16x4xf32>, vector<16x16x4xf32>, vector<16x16x4xf32>, vector<16x16x4xf32>, vector<16x16x4xf32>, vector<16x16x4xf32>, vector<16x16x4xf32> -> vector<16x16x36xf32>
    %41 = vector.shape_cast %40 : vector<16x16x36xf32> to vector<256x36xf32>
    %c0_12 = arith.constant 0 : index
    %c0_13 = arith.constant 0 : index
    %42 = vector.load %arg4[%c0_12, %c0_13] : memref<36x4xf32, #tpu.memory_space<vmem>>, vector<36x4xf32>
    %cst_14 = arith.constant dense<0.000000e+00> : vector<256x4xf32>
    %43 = tpu.matmul %41, %42, %cst_14 {dimension_numbers = #tpu.dot_dimension_numbers<[1], [0], [0], [1], [0, 0, 1, 1], [], []>} : vector<256x36xf32>, vector<36x4xf32>, vector<256x4xf32> -> vector<256x4xf32>
    %44 = vector.shape_cast %43 : vector<256x4xf32> to vector<16x16x4xf32>
    %c0_15 = arith.constant 0 : index
    %c0_16 = arith.constant 0 : index
    %45 = vector.load %arg5[%c0_15, %c0_16] : memref<1x4xf32, #tpu.memory_space<vmem>>, vector<1x4xf32>
    %46 = vector.shape_cast %45 : vector<1x4xf32> to vector<4xf32>
    %47 = vector.shape_cast %46 : vector<4xf32> to vector<1x1x4xf32>
    %48 = vector.broadcast %47 : vector<1x1x4xf32> to vector<16x16x4xf32>
    %49 = arith.addf %44, %48 : vector<16x16x4xf32>
    %50 = arith.addf %49, %1 : vector<16x16x4xf32>
    %c0_17 = arith.constant 0 : index
    %c0_18 = arith.constant 0 : index
    %c0_19 = arith.constant 0 : index
    %c0_20 = arith.constant 0 : index
    %51 = vector.load %arg6[%c0_17, %c0_18, %c0_19, %c0_20] : memref<1x16x16x4xf32, #tpu.memory_space<vmem>>, vector<1x16x16x4xf32>
    %52 = vector.shape_cast %51 : vector<1x16x16x4xf32> to vector<16x16x4xf32>
    %53 = vector.shape_cast %50 : vector<16x16x4xf32> to vector<1x16x16x4xf32>
    tpu.vector_store %arg6[%c0_17, %c0_18, %c0_19, %c0_20], %53 {strides = array<i32>} : memref<1x16x16x4xf32, #tpu.memory_space<vmem>>, vector<1x16x16x4xf32>,
    return
  }
  func.func @transform_0(%arg0: i32) -> (i32, i32, i32, i32) {
    %c0_i32 = arith.constant 0 : i32
    %c0_i32_0 = arith.constant 0 : i32
    %c0_i32_1 = arith.constant 0 : i32
    %c0_i32_2 = arith.constant 0 : i32
    return %arg0, %c0_i32, %c0_i32_0, %c0_i32_1 : i32, i32, i32, i32
  }
  func.func @transform_1(%arg0: i32) -> (i32, i32) {
    %c0_i32 = arith.constant 0 : i32
    %c0_i32_0 = arith.constant 0 : i32
    %c0_i32_1 = arith.constant 0 : i32
    return %c0_i32, %c0_i32_0 : i32, i32
  }
  func.func @transform_2(%arg0: i32) -> (i32, i32) {
    %c0_i32 = arith.constant 0 : i32
    %c0_i32_0 = arith.constant 0 : i32
    %c0_i32_1 = arith.constant 0 : i32
    return %c0_i32, %c0_i32_0 : i32, i32
  }
  func.func @transform_3(%arg0: i32) -> (i32, i32) {
    %c0_i32 = arith.constant 0 : i32
    %c0_i32_0 = arith.constant 0 : i32
    %c0_i32_1 = arith.constant 0 : i32
    return %c0_i32, %c0_i32_0 : i32, i32
  }
  func.func @transform_4(%arg0: i32) -> (i32, i32) {
    %c0_i32 = arith.constant 0 : i32
    %c0_i32_0 = arith.constant 0 : i32
    %c0_i32_1 = arith.constant 0 : i32
    return %c0_i32, %c0_i32_0 : i32, i32
  }
  func.func @transform_5(%arg0: i32) -> (i32, i32, i32, i32) {
    %c0_i32 = arith.constant 0 : i32
    %c0_i32_0 = arith.constant 0 : i32
    %c0_i32_1 = arith.constant 0 : i32
    %c0_i32_2 = arith.constant 0 : i32
    return %arg0, %c0_i32, %c0_i32_0, %c0_i32_1 : i32, i32, i32, i32
  }
}

</mosaic_0001>

<llo_original>
// kernel: tpu_custom_call.1
$region0: #{tpu_custom_call.1}
  #allocation0 [shape = 'u32[]', space=smem, size = 0x4, offset = 0x4, fixed_abs, tag = 'smem constant byte address 0x4 - core index']
  #allocation1 [shape = 'u32[144,128]{1,0:T(1,128)}', space=vmem, size = 0x12000, scoped, tag = 'internal scratch']
  %s0 = inlined_call_operand.vmem [shape: f32[2,16,16,4], index: 0, kind: input, shape index: {}]
  %s1 = inlined_call_operand.vmem [shape: f32[36,4], index: 1, kind: input, shape index: {}]
  %s2 = inlined_call_operand.vmem [shape: f32[1,4], index: 2, kind: input, shape index: {}]
  %s3 = inlined_call_operand.vmem [shape: f32[36,4], index: 3, kind: input, shape index: {}]
  %s4 = inlined_call_operand.vmem [shape: f32[1,4], index: 4, kind: input, shape index: {}]
  %s5 = inlined_call_operand.vmem [shape: f32[2,16,16,4], index: 5, kind: output, shape index: {}]
  %s6 = sld [smem:[#allocation0]]
  $region53: #{tpu_custom_call.1} parent=0
    _
  %s8 = ssub.s32 1, %s6
  %s9 = scalar_select 0, %s8, %s6
  loop: start=0, step=1, limit=4
  $region2: #{tpu_custom_call.1} parent=0 // loop_pre_header
    _
  $region3: #{tpu_custom_call.1} parent=0 // loop_header
    %s11 = sphi 0, %s15
    %p12 = scmp.ge.s32.totalorder %s11, 4
    %s21 = sphi 0, %s23
    %s24 = sphi 0, %s21
    %s25 = sphi 0, %s24
    %s41 = sphi 0, %s25
    %s45 = sphi 0, %s45
    %s47 = sphi 0, %s45
    %s48 = sphi 0, %s47
    %s62 = sphi 0, %s48
    %s66 = sphi 0, %s66
    %s68 = sphi 0, %s66
    %s69 = sphi 0, %s68
    %s83 = sphi 0, %s69
    %s87 = sphi 0, %s87
    %s89 = sphi 0, %s87
    %s90 = sphi 0, %s89
    %s104 = sphi 0, %s90
    %s108 = sphi 0, %s108
    %s110 = sphi 0, %s108
    %s111 = sphi 0, %s110
    %s125 = sphi 0, %s111
    %s131 = sphi 0, %s133
    %s134 = sphi 0, %s131
    %s135 = sphi 0, %s134
    %s151 = sphi 0, %s135
  $region4: #{tpu_custom_call.1} parent=0 // loop_header_branch
    %14 = sbr.rel (%p12) target = $region8
  $region5: #{tpu_custom_call.1} parent=0 // loop_body
    %s16 = ssub.s32 %s11, 1
    %s17 = ssub.s32 %s11, 2
    %s18 = sadd.s32 %s11, 1
    %s19 = ssub.s32 %s11, %s18
    %p20 = scmp.eq.s32.totalorder %s19, 0
    %s22 = sadd.s32 %s21, 1
    %s23 = scalar_select %p20, %s21, %s22
    %p26 = pneg %p20
    %p27 = scmp.eq.s32.totalorder %s11, 1
    %p28 = por %p26, %p27
    %p29 = scmp.ne.s32.totalorder %s21, %s24
    %p30 = scmp.eq.s32.totalorder %s11, 0
    %p31 = por %p29, %p30
    %p32 = scmp.ne.s32.totalorder %s21, %s24
    %p33 = scmp.eq.s32.totalorder %s16, 1
    %p34 = por %p32, %p33
    %p35 = scmp.ne.s32.totalorder %s24, %s25
    %p36 = scmp.eq.s32.totalorder %s16, 0
    %p37 = por %p35, %p36
    %p38 = scmp.ne.s32.totalorder %s24, %s25
    %p39 = scmp.eq.s32.totalorder %s17, 1
    %p40 = por %p38, %p39
    %p42 = scmp.ne.s32.totalorder %s25, %s41
    %p43 = scmp.eq.s32.totalorder %s17, 0
    %p44 = por %p42, %p43
    %s46 = sadd.s32 %s45, 1
    %p49 = scmp.eq.s32.totalorder %s11, 1
    %p50 = scmp.ne.s32.totalorder %s45, %s47
    %p51 = scmp.eq.s32.totalorder %s11, 0
    %p52 = por %p50, %p51
    %p53 = scmp.ne.s32.totalorder %s45, %s47
    %p54 = scmp.eq.s32.totalorder %s16, 1
    %p55 = por %p53, %p54
    %p56 = scmp.ne.s32.totalorder %s47, %s48
    %p57 = scmp.eq.s32.totalorder %s16, 0
    %p58 = por %p56, %p57
    %p59 = scmp.ne.s32.totalorder %s47, %s48
    %p60 = scmp.eq.s32.totalorder %s17, 1
    %p61 = por %p59, %p60
    %p63 = scmp.ne.s32.totalorder %s48, %s62
    %p64 = scmp.eq.s32.totalorder %s17, 0
    %p65 = por %p63, %p64
    %s67 = sadd.s32 %s66, 1
    %p70 = scmp.eq.s32.totalorder %s11, 1
    %p71 = scmp.ne.s32.totalorder %s66, %s68
    %p72 = scmp.eq.s32.totalorder %s11, 0
    %p73 = por %p71, %p72
    %p74 = scmp.ne.s32.totalorder %s66, %s68
    %p75 = scmp.eq.s32.totalorder %s16, 1
    %p76 = por %p74, %p75
    %p77 = scmp.ne.s32.totalorder %s68, %s69
    %p78 = scmp.eq.s32.totalorder %s16, 0
    %p79 = por %p77, %p78
    %p80 = scmp.ne.s32.totalorder %s68, %s69
    %p81 = scmp.eq.s32.totalorder %s17, 1
    %p82 = por %p80, %p81
    %p84 = scmp.ne.s32.totalorder %s69, %s83
    %p85 = scmp.eq.s32.totalorder %s17, 0
    %p86 = por %p84, %p85
    %s88 = sadd.s32 %s87, 1
    %p91 = scmp.eq.s32.totalorder %s11, 1
    %p92 = scmp.ne.s32.totalorder %s87, %s89
    %p93 = scmp.eq.s32.totalorder %s11, 0
    %p94 = por %p92, %p93
    %p95 = scmp.ne.s32.totalorder %s87, %s89
    %p96 = scmp.eq.s32.totalorder %s16, 1
    %p97 = por %p95, %p96
    %p98 = scmp.ne.s32.totalorder %s89, %s90
    %p99 = scmp.eq.s32.totalorder %s16, 0
    %p100 = por %p98, %p99
    %p101 = scmp.ne.s32.totalorder %s89, %s90
    %p102 = scmp.eq.s32.totalorder %s17, 1
    %p103 = por %p101, %p102
    %p105 = scmp.ne.s32.totalorder %s90, %s104
    %p106 = scmp.eq.s32.totalorder %s17, 0
    %p107 = por %p105, %p106
    %s109 = sadd.s32 %s108, 1
    %p112 = scmp.eq.s32.totalorder %s11, 1
    %p113 = scmp.ne.s32.totalorder %s108, %s110
    %p114 = scmp.eq.s32.totalorder %s11, 0
    %p115 = por %p113, %p114
    %p116 = scmp.ne.s32.totalorder %s108, %s110
    %p117 = scmp.eq.s32.totalorder %s16, 1
    %p118 = por %p116, %p117
    %p119 = scmp.ne.s32.totalorder %s110, %s111
    %p120 = scmp.eq.s32.totalorder %s16, 0
    %p121 = por %p119, %p120
    %p122 = scmp.ne.s32.totalorder %s110, %s111
    %p123 = scmp.eq.s32.totalorder %s17, 1
    %p124 = por %p122, %p123
    %p126 = scmp.ne.s32.totalorder %s111, %s125
    %p127 = scmp.eq.s32.totalorder %s17, 0
    %p128 = por %p126, %p127
    %s129 = ssub.s32 %s11, %s18
    %p130 = scmp.eq.s32.totalorder %s129, 0
    %s132 = sadd.s32 %s131, 1
    %s133 = scalar_select %p130, %s131, %s132
    %p136 = pneg %p130
    %p137 = scmp.eq.s32.totalorder %s11, 1
    %p138 = por %p136, %p137
    %p139 = scmp.ne.s32.totalorder %s131, %s134
    %p140 = scmp.eq.s32.totalorder %s11, 0
    %p141 = por %p139, %p140
    %p142 = scmp.ne.s32.totalorder %s131, %s134
    %p143 = scmp.eq.s32.totalorder %s16, 1
    %p144 = por %p142, %p143
    %p145 = scmp.ne.s32.totalorder %s134, %s135
    %p146 = scmp.eq.s32.totalorder %s16, 0
    %p147 = por %p145, %p146
    %p148 = scmp.ne.s32.totalorder %s134, %s135
    %p149 = scmp.eq.s32.totalorder %s17, 1
    %p150 = por %p148, %p149
    %p152 = scmp.ne.s32.totalorder %s135, %s151
    %p153 = scmp.eq.s32.totalorder %s17, 0
    %p154 = por %p152, %p153
    %p155 = scmp.le.s32.totalorder 1, %s11
    %p156 = scmp.lt.s32.totalorder %s11, 3
    %p157 = pnand %p155, %p156
    %p158 = pneg %p157
    // Predicated region
    $region9: #{tpu_custom_call.1} parent=5 // pred_check
      _
    $region10: #{tpu_custom_call.1} parent=5 // pred_check_branch
      %160 = sbr.rel (%p157) target = $region12
    $region11: #{tpu_custom_call.1} parent=5 // pred_region
      %s161 = ssub.s32 %s11, 1
      // Predicated region
      $region13: #{tpu_custom_call.1} parent=11 // pred_check
        %p162 = pneg %p58
      $region14: #{tpu_custom_call.1} parent=11 // pred_check_branch
        %164 = sbr.rel (%p162) target = $region16
      $region15: #{tpu_custom_call.1} parent=11 // pred_region
        _
      $region16: #{tpu_custom_call.1} parent=11 // pred_fallthru
        _
      // Predicated region
      $region17: #{tpu_custom_call.1} parent=11 // pred_check
        %p165 = pneg %p79
      $region18: #{tpu_custom_call.1} parent=11 // pred_check_branch
        %167 = sbr.rel (%p165) target = $region20
      $region19: #{tpu_custom_call.1} parent=11 // pred_region
        _
      $region20: #{tpu_custom_call.1} parent=11 // pred_fallthru
        _
      // Predicated region
      $region21: #{tpu_custom_call.1} parent=11 // pred_check
        %p168 = pneg %p100
      $region22: #{tpu_custom_call.1} parent=11 // pred_check_branch
        %170 = sbr.rel (%p168) target = $region24
      $region23: #{tpu_custom_call.1} parent=11 // pred_region
        _
      $region24: #{tpu_custom_call.1} parent=11 // pred_fallthru
        _
      // Predicated region
      $region25: #{tpu_custom_call.1} parent=11 // pred_check
        %p171 = pneg %p121
      $region26: #{tpu_custom_call.1} parent=11 // pred_check_branch
        %173 = sbr.rel (%p171) target = $region28
      $region27: #{tpu_custom_call.1} parent=11 // pred_region
        _
      $region28: #{tpu_custom_call.1} parent=11 // pred_fallthru
        _
    $region12: #{tpu_custom_call.1} parent=5 // pred_fallthru
      _
    %p174 = scmp.lt.s32.totalorder %s11, 2
    // Predicated region
    $region29: #{tpu_custom_call.1} parent=5 // pred_check
      %p175 = pneg %p174
    $region30: #{tpu_custom_call.1} parent=5 // pred_check_branch
      %177 = sbr.rel (%p175) target = $region32
    $region31: #{tpu_custom_call.1} parent=5 // pred_region
      // Predicated region
      $region33: #{tpu_custom_call.1} parent=31 // pred_check
        %p178 = pneg %p31
      $region34: #{tpu_custom_call.1} parent=31 // pred_check_branch
        %180 = sbr.rel (%p178) target = $region36
      $region35: #{tpu_custom_call.1} parent=31 // pred_region
        %p181 = scmp.lt.s32.totalorder %s11, 1
        %s182 = scalar_select %p181, %s11, 1
        %s183 = smul.addr %s182, 32
        %s184 = smul.addr %s183, 8
        %s185 = scalar_lea.vmem %s0, %s184
      $region36: #{tpu_custom_call.1} parent=31 // pred_fallthru
        _
    $region32: #{tpu_custom_call.1} parent=5 // pred_fallthru
      _
    %p186 = scmp.le.s32.totalorder 1, %s11
    %p187 = scmp.lt.s32.totalorder %s11, 3
    %p188 = pnand %p186, %p187
    %p189 = pneg %p188
    // Predicated region
    $region37: #{tpu_custom_call.1} parent=5 // pred_check
      _
    $region38: #{tpu_custom_call.1} parent=5 // pred_check_branch
      %191 = sbr.rel (%p188) target = $region40
    $region39: #{tpu_custom_call.1} parent=5 // pred_region
      %s192 = ssub.s32 %s11, 1
      %p193 = scmp.lt.s32.totalorder %s16, 1
      %s194 = scalar_select %p193, %s16, 1
      %s195 = smul.addr %s194, 32
      %s196 = smul.addr %s195, 8
      %s197 = scalar_lea.vmem %s0, %s196
      %p198 = pneg %p37
      %p199 = pneg %p34
      %p200 = pneg %p58
      %p201 = pneg %p55
      %p202 = pneg %p79
      %p203 = pneg %p76
      %p204 = pneg %p100
      %p205 = pneg %p97
      %p206 = pneg %p121
      %p207 = pneg %p118
      %p208 = pneg %p147
      %p209 = pneg %p144
      %p210 = scmp.lt.s32.totalorder %s16, 1
      %s211 = scalar_select %p210, %s16, 1
      %s212 = smul.addr %s211, 32
      %s213 = smul.addr %s212, 8
      %s214 = scalar_lea.vmem %s5, %s213
      %p215 = scmp.lt.s32.totalorder %s16, 1
      %s216 = scalar_select %p215, %s16, 1
      %s217 = smul.addr %s216, 32
      %s218 = smul.addr %s217, 8
      %s219 = scalar_lea.vmem %s0, %s218
      %p220 = scmp.lt.s32.totalorder %s16, 1
      %s221 = scalar_select %p220, %s16, 1
      %s222 = smul.addr %s221, 32
      %s223 = smul.addr %s222, 8
      %s224 = scalar_lea.vmem %s5, %s223
      %v225 = vld [vmem:[%s219] sm:$0xff]
      %v226 = vld [vmem:[%s219 + $0x8] sm:$0xff]
      %v227 = vld [vmem:[%s219 + $0x10] sm:$0xff]
      %v228 = vld [vmem:[%s219 + $0x18] sm:$0xff]
      %v229 = vld [vmem:[%s219 + $0x20] sm:$0xff]
      %v230 = vld [vmem:[%s219 + $0x28] sm:$0xff]
      %v231 = vld [vmem:[%s219 + $0x30] sm:$0xff]
      %v232 = vld [vmem:[%s219 + $0x38] sm:$0xff]
      %v233 = vld [vmem:[%s219 + $0x40] sm:$0xff]
      %v234 = vld [vmem:[%s219 + $0x48] sm:$0xff]
      %v235 = vld [vmem:[%s219 + $0x50] sm:$0xff]
      %v236 = vld [vmem:[%s219 + $0x58] sm:$0xff]
      %v237 = vld [vmem:[%s219 + $0x60] sm:$0xff]
      %v238 = vld [vmem:[%s219 + $0x68] sm:$0xff]
      %v239 = vld [vmem:[%s219 + $0x70] sm:$0xff]
      %v240 = vld [vmem:[%s219 + $0x78] sm:$0xff]
      %v241 = vld [vmem:[%s219 + $0x80] sm:$0xff]
      %v242 = vld [vmem:[%s219 + $0x88] sm:$0xff]
      %v243 = vld [vmem:[%s219 + $0x90] sm:$0xff]
      %v244 = vld [vmem:[%s219 + $0x98] sm:$0xff]
      %v245 = vld [vmem:[%s219 + $0xa0] sm:$0xff]
      %v246 = vld [vmem:[%s219 + $0xa8] sm:$0xff]
      %v247 = vld [vmem:[%s219 + $0xb0] sm:$0xff]
      %v248 = vld [vmem:[%s219 + $0xb8] sm:$0xff]
      %v249 = vld [vmem:[%s219 + $0xc0] sm:$0xff]
      %v250 = vld [vmem:[%s219 + $0xc8] sm:$0xff]
      %v251 = vld [vmem:[%s219 + $0xd0] sm:$0xff]
      %v252 = vld [vmem:[%s219 + $0xd8] sm:$0xff]
      %v253 = vld [vmem:[%s219 + $0xe0] sm:$0xff]
      %v254 = vld [vmem:[%s219 + $0xe8] sm:$0xff]
      %v255 = vld [vmem:[%s219 + $0xf0] sm:$0xff]
      %v256 = vld [vmem:[%s219 + $0xf8] sm:$0xff]
      %vm289 = vcmask 1040384
      %v290 = vrot.slane %v225, 7
      %v291 = vrot.slane %v226, 7
      %v292 = vsel %vm289, %v290, %v291
      %v293 = vrot.slane %v227, 7
      %v294 = vrot.slane %v228, 7
      %v295 = vsel %vm289, %v293, %v294
      %v296 = vrot.slane %v229, 7
      %v297 = vrot.slane %v230, 7
      %v298 = vsel %vm289, %v296, %v297
      %v299 = vrot.slane %v231, 7
      %v300 = vrot.slane %v232, 7
      %v301 = vsel %vm289, %v299, %v300
      %v302 = vrot.slane %v233, 7
      %v303 = vrot.slane %v234, 7
      %v304 = vsel %vm289, %v302, %v303
      %v305 = vrot.slane %v235, 7
      %v306 = vrot.slane %v236, 7
      %v307 = vsel %vm289, %v305, %v306
      %v308 = vrot.slane %v237, 7
      %v309 = vrot.slane %v238, 7
      %v310 = vsel %vm289, %v308, %v309
      %v311 = vrot.slane %v239, 7
      %v312 = vrot.slane %v240, 7
      %v313 = vsel %vm289, %v311, %v312
      %v314 = vrot.slane %v241, 7
      %v315 = vrot.slane %v242, 7
      %v316 = vsel %vm289, %v314, %v315
      %v317 = vrot.slane %v243, 7
      %v318 = vrot.slane %v244, 7
      %v319 = vsel %vm289, %v317, %v318
      %v320 = vrot.slane %v245, 7
      %v321 = vrot.slane %v246, 7
      %v322 = vsel %vm289, %v320, %v321
      %v323 = vrot.slane %v247, 7
      %v324 = vrot.slane %v248, 7
      %v325 = vsel %vm289, %v323, %v324
      %v326 = vrot.slane %v249, 7
      %v327 = vrot.slane %v250, 7
      %v328 = vsel %vm289, %v326, %v327
      %v329 = vrot.slane %v251, 7
      %v330 = vrot.slane %v252, 7
      %v331 = vsel %vm289, %v329, %v330
      %v332 = vrot.slane %v253, 7
      %v333 = vrot.slane %v254, 7
      %v334 = vsel %vm289, %v332, %v333
      %v335 = vrot.slane %v255, 7
      %v336 = vrot.slane %v256, 7
      %v337 = vsel %vm289, %v335, %v336
      %v385 = vsel %vm289, 0.0, %v290
      %v386 = vsel %vm289, 0.0, %v293
      %v387 = vsel %vm289, 0.0, %v296
      %v388 = vsel %vm289, 0.0, %v299
      %v389 = vsel %vm289, 0.0, %v302
      %v390 = vsel %vm289, 0.0, %v305
      %v391 = vsel %vm289, 0.0, %v308
      %v392 = vsel %vm289, 0.0, %v311
      %v393 = vsel %vm289, 0.0, %v314
      %v394 = vsel %vm289, 0.0, %v317
      %v395 = vsel %vm289, 0.0, %v320
      %v396 = vsel %vm289, 0.0, %v323
      %v397 = vsel %vm289, 0.0, %v326
      %v398 = vsel %vm289, 0.0, %v329
      %v399 = vsel %vm289, 0.0, %v332
      %v400 = vsel %vm289, 0.0, %v335
      %v401 = vsel %vm289, %v291, 0.0
      %v402 = vsel %vm289, %v294, 0.0
      %v403 = vsel %vm289, %v297, 0.0
      %v404 = vsel %vm289, %v300, 0.0
      %v405 = vsel %vm289, %v303, 0.0
      %v406 = vsel %vm289, %v306, 0.0
      %v407 = vsel %vm289, %v309, 0.0
      %v408 = vsel %vm289, %v312, 0.0
      %v409 = vsel %vm289, %v315, 0.0
      %v410 = vsel %vm289, %v318, 0.0
      %v411 = vsel %vm289, %v321, 0.0
      %v412 = vsel %vm289, %v324, 0.0
      %v413 = vsel %vm289, %v327, 0.0
      %v414 = vsel %vm289, %v330, 0.0
      %v415 = vsel %vm289, %v333, 0.0
      %v416 = vsel %vm289, %v336, 0.0
      %vm448 = vcmask 1046528
      %v449 = vrot.slane 0.0, 1
      %v450 = vsel %vm448, %v449, %v449
      %v451 = vrot.slane %v385, 1
      %v452 = vrot.slane %v292, 1
      %v453 = vsel %vm448, %v451, %v452
      %v454 = vrot.slane %v401, 1
      %v455 = vsel %vm448, %v452, %v454
      %v456 = vrot.slane %v386, 1
      %v457 = vrot.slane %v295, 1
      %v458 = vsel %vm448, %v456, %v457
      %v459 = vrot.slane %v402, 1
      %v460 = vsel %vm448, %v457, %v459
      %v461 = vrot.slane %v387, 1
      %v462 = vrot.slane %v298, 1
      %v463 = vsel %vm448, %v461, %v462
      %v464 = vrot.slane %v403, 1
      %v465 = vsel %vm448, %v462, %v464
      %v466 = vrot.slane %v388, 1
      %v467 = vrot.slane %v301, 1
      %v468 = vsel %vm448, %v466, %v467
      %v469 = vrot.slane %v404, 1
      %v470 = vsel %vm448, %v467, %v469
      %v471 = vrot.slane %v389, 1
      %v472 = vrot.slane %v304, 1
      %v473 = vsel %vm448, %v471, %v472
      %v474 = vrot.slane %v405, 1
      %v475 = vsel %vm448, %v472, %v474
      %v476 = vrot.slane %v390, 1
      %v477 = vrot.slane %v307, 1
      %v478 = vsel %vm448, %v476, %v477
      %v479 = vrot.slane %v406, 1
      %v480 = vsel %vm448, %v477, %v479
      %v481 = vrot.slane %v391, 1
      %v482 = vrot.slane %v310, 1
      %v483 = vsel %vm448, %v481, %v482
      %v484 = vrot.slane %v407, 1
      %v485 = vsel %vm448, %v482, %v484
      %v486 = vrot.slane %v392, 1
      %v487 = vrot.slane %v313, 1
      %v488 = vsel %vm448, %v486, %v487
      %v489 = vrot.slane %v408, 1
      %v490 = vsel %vm448, %v487, %v489
      %v491 = vrot.slane %v393, 1
      %v492 = vrot.slane %v316, 1
      %v493 = vsel %vm448, %v491, %v492
      %v494 = vrot.slane %v409, 1
      %v495 = vsel %vm448, %v492, %v494
      %v496 = vrot.slane %v394, 1
      %v497 = vrot.slane %v319, 1
      %v498 = vsel %vm448, %v496, %v497
      %v499 = vrot.slane %v410, 1
      %v500 = vsel %vm448, %v497, %v499
      %v501 = vrot.slane %v395, 1
      %v502 = vrot.slane %v322, 1
      %v503 = vsel %vm448, %v501, %v502
      %v504 = vrot.slane %v411, 1
      %v505 = vsel %vm448, %v502, %v504
      %v506 = vrot.slane %v396, 1
      %v507 = vrot.slane %v325, 1
      %v508 = vsel %vm448, %v506, %v507
      %v509 = vrot.slane %v412, 1
      %v510 = vsel %vm448, %v507, %v509
      %v511 = vrot.slane %v397, 1
      %v512 = vrot.slane %v328, 1
      %v513 = vsel %vm448, %v511, %v512
      %v514 = vrot.slane %v413, 1
      %v515 = vsel %vm448, %v512, %v514
      %v516 = vrot.slane %v398, 1
      %v517 = vrot.slane %v331, 1
      %v518 = vsel %vm448, %v516, %v517
      %v519 = vrot.slane %v414, 1
      %v520 = vsel %vm448, %v517, %v519
      %v521 = vrot.slane %v399, 1
      %v522 = vrot.slane %v334, 1
      %v523 = vsel %vm448, %v521, %v522
      %v524 = vrot.slane %v415, 1
      %v525 = vsel %vm448, %v522, %v524
      %526 = vrot.lane.b32.xlu0 %v450, 4
      %v527 = vpop.permute.xlu0 %526
      %528 = vrot.lane.b32.xlu0 %v453, 4
      %v529 = vpop.permute.xlu0 %528
      %530 = vrot.lane.b32.xlu0 %v455, 4
      %v531 = vpop.permute.xlu0 %530
      %532 = vrot.lane.b32.xlu0 %v458, 4
      %v533 = vpop.permute.xlu0 %532
      %534 = vrot.lane.b32.xlu0 %v460, 4
      %v535 = vpop.permute.xlu0 %534
      %536 = vrot.lane.b32.xlu0 %v463, 4
      %v537 = vpop.permute.xlu0 %536
      %538 = vrot.lane.b32.xlu0 %v465, 4
      %v539 = vpop.permute.xlu0 %538
      %540 = vrot.lane.b32.xlu0 %v468, 4
      %v541 = vpop.permute.xlu0 %540
      %542 = vrot.lane.b32.xlu0 %v470, 4
      %v543 = vpop.permute.xlu0 %542
      %544 = vrot.lane.b32.xlu0 %v473, 4
      %v545 = vpop.permute.xlu0 %544
      %546 = vrot.lane.b32.xlu0 %v475, 4
      %v547 = vpop.permute.xlu0 %546
      %548 = vrot.lane.b32.xlu0 %v478, 4
      %v549 = vpop.permute.xlu0 %548
      %550 = vrot.lane.b32.xlu0 %v480, 4
      %v551 = vpop.permute.xlu0 %550
      %552 = vrot.lane.b32.xlu0 %v483, 4
      %v553 = vpop.permute.xlu0 %552
      %554 = vrot.lane.b32.xlu0 %v485, 4
      %v555 = vpop.permute.xlu0 %554
      %556 = vrot.lane.b32.xlu0 %v488, 4
      %v557 = vpop.permute.xlu0 %556
      %558 = vrot.lane.b32.xlu0 %v490, 4
      %v559 = vpop.permute.xlu0 %558
      %560 = vrot.lane.b32.xlu0 %v493, 4
      %v561 = vpop.permute.xlu0 %560
      %562 = vrot.lane.b32.xlu0 %v495, 4
      %v563 = vpop.permute.xlu0 %562
      %564 = vrot.lane.b32.xlu0 %v498, 4
      %v565 = vpop.permute.xlu0 %564
      %566 = vrot.lane.b32.xlu0 %v500, 4
      %v567 = vpop.permute.xlu0 %566
      %568 = vrot.lane.b32.xlu0 %v503, 4
      %v569 = vpop.permute.xlu0 %568
      %570 = vrot.lane.b32.xlu0 %v505, 4
      %v571 = vpop.permute.xlu0 %570
      %572 = vrot.lane.b32.xlu0 %v508, 4
      %v573 = vpop.permute.xlu0 %572
      %574 = vrot.lane.b32.xlu0 %v510, 4
      %v575 = vpop.permute.xlu0 %574
      %576 = vrot.lane.b32.xlu0 %v513, 4
      %v577 = vpop.permute.xlu0 %576
      %578 = vrot.lane.b32.xlu0 %v515, 4
      %v579 = vpop.permute.xlu0 %578
      %580 = vrot.lane.b32.xlu0 %v518, 4
      %v581 = vpop.permute.xlu0 %580
      %582 = vrot.lane.b32.xlu0 %v520, 4
      %v583 = vpop.permute.xlu0 %582
      %584 = vrot.lane.b32.xlu0 %v523, 4
      %v585 = vpop.permute.xlu0 %584
      %586 = vrot.lane.b32.xlu0 %v525, 4
      %v587 = vpop.permute.xlu0 %586
      %vm619 = vcmask 1045504
      %v620 = vrot.slane 0.0, 2
      %v621 = vsel %vm619, %v620, %v620
      %v622 = vrot.slane %v385, 2
      %v623 = vrot.slane %v292, 2
      %v624 = vsel %vm619, %v622, %v623
      %v625 = vrot.slane %v401, 2
      %v626 = vsel %vm619, %v623, %v625
      %v627 = vrot.slane %v386, 2
      %v628 = vrot.slane %v295, 2
      %v629 = vsel %vm619, %v627, %v628
      %v630 = vrot.slane %v402, 2
      %v631 = vsel %vm619, %v628, %v630
      %v632 = vrot.slane %v387, 2
      %v633 = vrot.slane %v298, 2
      %v634 = vsel %vm619, %v632, %v633
      %v635 = vrot.slane %v403, 2
      %v636 = vsel %vm619, %v633, %v635
      %v637 = vrot.slane %v388, 2
      %v638 = vrot.slane %v301, 2
      %v639 = vsel %vm619, %v637, %v638
      %v640 = vrot.slane %v404, 2
      %v641 = vsel %vm619, %v638, %v640
      %v642 = vrot.slane %v389, 2
      %v643 = vrot.slane %v304, 2
      %v644 = vsel %vm619, %v642, %v643
      %v645 = vrot.slane %v405, 2
      %v646 = vsel %vm619, %v643, %v645
      %v647 = vrot.slane %v390, 2
      %v648 = vrot.slane %v307, 2
      %v649 = vsel %vm619, %v647, %v648
      %v650 = vrot.slane %v406, 2
      %v651 = vsel %vm619, %v648, %v650
      %v652 = vrot.slane %v391, 2
      %v653 = vrot.slane %v310, 2
      %v654 = vsel %vm619, %v652, %v653
      %v655 = vrot.slane %v407, 2
      %v656 = vsel %vm619, %v653, %v655
      %v657 = vrot.slane %v392, 2
      %v658 = vrot.slane %v313, 2
      %v659 = vsel %vm619, %v657, %v658
      %v660 = vrot.slane %v408, 2
      %v661 = vsel %vm619, %v658, %v660
      %v662 = vrot.slane %v393, 2
      %v663 = vrot.slane %v316, 2
      %v664 = vsel %vm619, %v662, %v663
      %v665 = vrot.slane %v409, 2
      %v666 = vsel %vm619, %v663, %v665
      %v667 = vrot.slane %v394, 2
      %v668 = vrot.slane %v319, 2
      %v669 = vsel %vm619, %v667, %v668
      %v670 = vrot.slane %v410, 2
      %v671 = vsel %vm619, %v668, %v670
      %v672 = vrot.slane %v395, 2
      %v673 = vrot.slane %v322, 2
      %v674 = vsel %vm619, %v672, %v673
      %v675 = vrot.slane %v411, 2
      %v676 = vsel %vm619, %v673, %v675
      %v677 = vrot.slane %v396, 2
      %v678 = vrot.slane %v325, 2
      %v679 = vsel %vm619, %v677, %v678
      %v680 = vrot.slane %v412, 2
      %v681 = vsel %vm619, %v678, %v680
      %v682 = vrot.slane %v397, 2
      %v683 = vrot.slane %v328, 2
      %v684 = vsel %vm619, %v682, %v683
      %v685 = vrot.slane %v413, 2
      %v686 = vsel %vm619, %v683, %v685
      %v687 = vrot.slane %v398, 2
      %v688 = vrot.slane %v331, 2
      %v689 = vsel %vm619, %v687, %v688
      %v690 = vrot.slane %v414, 2
      %v691 = vsel %vm619, %v688, %v690
      %v692 = vrot.slane %v399, 2
      %v693 = vrot.slane %v334, 2
      %v694 = vsel %vm619, %v692, %v693
      %v695 = vrot.slane %v415, 2
      %v696 = vsel %vm619, %v693, %v695
      %697 = vrot.lane.b32.xlu0 %v621, 8
      %v698 = vpop.permute.xlu0 %697
      %699 = vrot.lane.b32.xlu0 %v624, 8
      %v700 = vpop.permute.xlu0 %699
      %701 = vrot.lane.b32.xlu0 %v626, 8
      %v702 = vpop.permute.xlu0 %701
      %703 = vrot.lane.b32.xlu0 %v629, 8
      %v704 = vpop.permute.xlu0 %703
      %705 = vrot.lane.b32.xlu0 %v631, 8
      %v706 = vpop.permute.xlu0 %705
      %707 = vrot.lane.b32.xlu0 %v634, 8
      %v708 = vpop.permute.xlu0 %707
      %709 = vrot.lane.b32.xlu0 %v636, 8
      %v710 = vpop.permute.xlu0 %709
      %711 = vrot.lane.b32.xlu0 %v639, 8
      %v712 = vpop.permute.xlu0 %711
      %713 = vrot.lane.b32.xlu0 %v641, 8
      %v714 = vpop.permute.xlu0 %713
      %715 = vrot.lane.b32.xlu0 %v644, 8
      %v716 = vpop.permute.xlu0 %715
      %717 = vrot.lane.b32.xlu0 %v646, 8
      %v718 = vpop.permute.xlu0 %717
      %719 = vrot.lane.b32.xlu0 %v649, 8
      %v720 = vpop.permute.xlu0 %719
      %721 = vrot.lane.b32.xlu0 %v651, 8
      %v722 = vpop.permute.xlu0 %721
      %723 = vrot.lane.b32.xlu0 %v654, 8
      %v724 = vpop.permute.xlu0 %723
      %725 = vrot.lane.b32.xlu0 %v656, 8
      %v726 = vpop.permute.xlu0 %725
      %727 = vrot.lane.b32.xlu0 %v659, 8
      %v728 = vpop.permute.xlu0 %727
      %729 = vrot.lane.b32.xlu0 %v661, 8
      %v730 = vpop.permute.xlu0 %729
      %731 = vrot.lane.b32.xlu0 %v664, 8
      %v732 = vpop.permute.xlu0 %731
      %733 = vrot.lane.b32.xlu0 %v666, 8
      %v734 = vpop.permute.xlu0 %733
      %735 = vrot.lane.b32.xlu0 %v669, 8
      %v736 = vpop.permute.xlu0 %735
      %737 = vrot.lane.b32.xlu0 %v671, 8
      %v738 = vpop.permute.xlu0 %737
      %739 = vrot.lane.b32.xlu0 %v674, 8
      %v740 = vpop.permute.xlu0 %739
      %741 = vrot.lane.b32.xlu0 %v676, 8
      %v742 = vpop.permute.xlu0 %741
      %743 = vrot.lane.b32.xlu0 %v679, 8
      %v744 = vpop.permute.xlu0 %743
      %745 = vrot.lane.b32.xlu0 %v681, 8
      %v746 = vpop.permute.xlu0 %745
      %747 = vrot.lane.b32.xlu0 %v684, 8
      %v748 = vpop.permute.xlu0 %747
      %749 = vrot.lane.b32.xlu0 %v686, 8
      %v750 = vpop.permute.xlu0 %749
      %751 = vrot.lane.b32.xlu0 %v689, 8
      %v752 = vpop.permute.xlu0 %751
      %753 = vrot.lane.b32.xlu0 %v691, 8
      %v754 = vpop.permute.xlu0 %753
      %755 = vrot.lane.b32.xlu0 %v694, 8
      %v756 = vpop.permute.xlu0 %755
      %757 = vrot.lane.b32.xlu0 %v696, 8
      %v758 = vpop.permute.xlu0 %757
      %791 = vrot.lane.b32.xlu0 %v385, 12
      %v792 = vpop.permute.xlu0 %791
      %793 = vrot.lane.b32.xlu0 %v292, 12
      %v794 = vpop.permute.xlu0 %793
      %795 = vrot.lane.b32.xlu0 %v386, 12
      %v796 = vpop.permute.xlu0 %795
      %797 = vrot.lane.b32.xlu0 %v295, 12
      %v798 = vpop.permute.xlu0 %797
      %799 = vrot.lane.b32.xlu0 %v387, 12
      %v800 = vpop.permute.xlu0 %799
      %801 = vrot.lane.b32.xlu0 %v298, 12
      %v802 = vpop.permute.xlu0 %801
      %803 = vrot.lane.b32.xlu0 %v388, 12
      %v804 = vpop.permute.xlu0 %803
      %805 = vrot.lane.b32.xlu0 %v301, 12
      %v806 = vpop.permute.xlu0 %805
      %807 = vrot.lane.b32.xlu0 %v389, 12
      %v808 = vpop.permute.xlu0 %807
      %809 = vrot.lane.b32.xlu0 %v304, 12
      %v810 = vpop.permute.xlu0 %809
      %811 = vrot.lane.b32.xlu0 %v390, 12
      %v812 = vpop.permute.xlu0 %811
      %813 = vrot.lane.b32.xlu0 %v307, 12
      %v814 = vpop.permute.xlu0 %813
      %815 = vrot.lane.b32.xlu0 %v391, 12
      %v816 = vpop.permute.xlu0 %815
      %817 = vrot.lane.b32.xlu0 %v310, 12
      %v818 = vpop.permute.xlu0 %817
      %819 = vrot.lane.b32.xlu0 %v392, 12
      %v820 = vpop.permute.xlu0 %819
      %821 = vrot.lane.b32.xlu0 %v313, 12
      %v822 = vpop.permute.xlu0 %821
      %823 = vrot.lane.b32.xlu0 %v393, 12
      %v824 = vpop.permute.xlu0 %823
      %825 = vrot.lane.b32.xlu0 %v316, 12
      %v826 = vpop.permute.xlu0 %825
      %827 = vrot.lane.b32.xlu0 %v394, 12
      %v828 = vpop.permute.xlu0 %827
      %829 = vrot.lane.b32.xlu0 %v319, 12
      %v830 = vpop.permute.xlu0 %829
      %831 = vrot.lane.b32.xlu0 %v395, 12
      %v832 = vpop.permute.xlu0 %831
      %833 = vrot.lane.b32.xlu0 %v322, 12
      %v834 = vpop.permute.xlu0 %833
      %835 = vrot.lane.b32.xlu0 %v396, 12
      %v836 = vpop.permute.xlu0 %835
      %837 = vrot.lane.b32.xlu0 %v325, 12
      %v838 = vpop.permute.xlu0 %837
      %839 = vrot.lane.b32.xlu0 %v397, 12
      %v840 = vpop.permute.xlu0 %839
      %841 = vrot.lane.b32.xlu0 %v328, 12
      %v842 = vpop.permute.xlu0 %841
      %843 = vrot.lane.b32.xlu0 %v398, 12
      %v844 = vpop.permute.xlu0 %843
      %845 = vrot.lane.b32.xlu0 %v331, 12
      %v846 = vpop.permute.xlu0 %845
      %847 = vrot.lane.b32.xlu0 %v399, 12
      %v848 = vpop.permute.xlu0 %847
      %849 = vrot.lane.b32.xlu0 %v334, 12
      %v850 = vpop.permute.xlu0 %849
      %851 = vrot.lane.b32.xlu0 %v400, 12
      %v852 = vpop.permute.xlu0 %851
      %853 = vrot.lane.b32.xlu0 %v337, 12
      %v854 = vpop.permute.xlu0 %853
      %v888 = vrot.slane %v400, 1
      %v889 = vrot.slane %v337, 1
      %v890 = vsel %vm448, %v888, %v889
      %v891 = vrot.slane %v416, 1
      %v892 = vsel %vm448, %v889, %v891
      %893 = vrot.lane.b32.xlu0 %v453, 16
      %v894 = vpop.permute.xlu0 %893
      %895 = vrot.lane.b32.xlu0 %v455, 16
      %v896 = vpop.permute.xlu0 %895
      %897 = vrot.lane.b32.xlu0 %v458, 16
      %v898 = vpop.permute.xlu0 %897
      %899 = vrot.lane.b32.xlu0 %v460, 16
      %v900 = vpop.permute.xlu0 %899
      %901 = vrot.lane.b32.xlu0 %v463, 16
      %v902 = vpop.permute.xlu0 %901
      %903 = vrot.lane.b32.xlu0 %v465, 16
      %v904 = vpop.permute.xlu0 %903
      %905 = vrot.lane.b32.xlu0 %v468, 16
      %v906 = vpop.permute.xlu0 %905
      %907 = vrot.lane.b32.xlu0 %v470, 16
      %v908 = vpop.permute.xlu0 %907
      %909 = vrot.lane.b32.xlu0 %v473, 16
      %v910 = vpop.permute.xlu0 %909
      %911 = vrot.lane.b32.xlu0 %v475, 16
      %v912 = vpop.permute.xlu0 %911
      %913 = vrot.lane.b32.xlu0 %v478, 16
      %v914 = vpop.permute.xlu0 %913
      %915 = vrot.lane.b32.xlu0 %v480, 16
      %v916 = vpop.permute.xlu0 %915
      %917 = vrot.lane.b32.xlu0 %v483, 16
      %v918 = vpop.permute.xlu0 %917
      %919 = vrot.lane.b32.xlu0 %v485, 16
      %v920 = vpop.permute.xlu0 %919
      %921 = vrot.lane.b32.xlu0 %v488, 16
      %v922 = vpop.permute.xlu0 %921
      %923 = vrot.lane.b32.xlu0 %v490, 16
      %v924 = vpop.permute.xlu0 %923
      %925 = vrot.lane.b32.xlu0 %v493, 16
      %v926 = vpop.permute.xlu0 %925
      %927 = vrot.lane.b32.xlu0 %v495, 16
      %v928 = vpop.permute.xlu0 %927
      %929 = vrot.lane.b32.xlu0 %v498, 16
      %v930 = vpop.permute.xlu0 %929
      %931 = vrot.lane.b32.xlu0 %v500, 16
      %v932 = vpop.permute.xlu0 %931
      %933 = vrot.lane.b32.xlu0 %v503, 16
      %v934 = vpop.permute.xlu0 %933
      %935 = vrot.lane.b32.xlu0 %v505, 16
      %v936 = vpop.permute.xlu0 %935
      %937 = vrot.lane.b32.xlu0 %v508, 16
      %v938 = vpop.permute.xlu0 %937
      %939 = vrot.lane.b32.xlu0 %v510, 16
      %v940 = vpop.permute.xlu0 %939
      %941 = vrot.lane.b32.xlu0 %v513, 16
      %v942 = vpop.permute.xlu0 %941
      %943 = vrot.lane.b32.xlu0 %v515, 16
      %v944 = vpop.permute.xlu0 %943
      %945 = vrot.lane.b32.xlu0 %v518, 16
      %v946 = vpop.permute.xlu0 %945
      %947 = vrot.lane.b32.xlu0 %v520, 16
      %v948 = vpop.permute.xlu0 %947
      %949 = vrot.lane.b32.xlu0 %v523, 16
      %v950 = vpop.permute.xlu0 %949
      %951 = vrot.lane.b32.xlu0 %v525, 16
      %v952 = vpop.permute.xlu0 %951
      %953 = vrot.lane.b32.xlu0 %v890, 16
      %v954 = vpop.permute.xlu0 %953
      %955 = vrot.lane.b32.xlu0 %v892, 16
      %v956 = vpop.permute.xlu0 %955
      %v989 = vrot.slane %v400, 2
      %v990 = vrot.slane %v337, 2
      %v991 = vsel %vm619, %v989, %v990
      %v992 = vrot.slane %v416, 2
      %v993 = vsel %vm619, %v990, %v992
      %994 = vrot.lane.b32.xlu0 %v624, 20
      %v995 = vpop.permute.xlu0 %994
      %996 = vrot.lane.b32.xlu0 %v626, 20
      %v997 = vpop.permute.xlu0 %996
      %998 = vrot.lane.b32.xlu0 %v629, 20
      %v999 = vpop.permute.xlu0 %998
      %1000 = vrot.lane.b32.xlu0 %v631, 20
      %v1001 = vpop.permute.xlu0 %1000
      %1002 = vrot.lane.b32.xlu0 %v634, 20
      %v1003 = vpop.permute.xlu0 %1002
      %1004 = vrot.lane.b32.xlu0 %v636, 20
      %v1005 = vpop.permute.xlu0 %1004
      %1006 = vrot.lane.b32.xlu0 %v639, 20
      %v1007 = vpop.permute.xlu0 %1006
      %1008 = vrot.lane.b32.xlu0 %v641, 20
      %v1009 = vpop.permute.xlu0 %1008
      %1010 = vrot.lane.b32.xlu0 %v644, 20
      %v1011 = vpop.permute.xlu0 %1010
      %1012 = vrot.lane.b32.xlu0 %v646, 20
      %v1013 = vpop.permute.xlu0 %1012
      %1014 = vrot.lane.b32.xlu0 %v649, 20
      %v1015 = vpop.permute.xlu0 %1014
      %1016 = vrot.lane.b32.xlu0 %v651, 20
      %v1017 = vpop.permute.xlu0 %1016
      %1018 = vrot.lane.b32.xlu0 %v654, 20
      %v1019 = vpop.permute.xlu0 %1018
      %1020 = vrot.lane.b32.xlu0 %v656, 20
      %v1021 = vpop.permute.xlu0 %1020
      %1022 = vrot.lane.b32.xlu0 %v659, 20
      %v1023 = vpop.permute.xlu0 %1022
      %1024 = vrot.lane.b32.xlu0 %v661, 20
      %v1025 = vpop.permute.xlu0 %1024
      %1026 = vrot.lane.b32.xlu0 %v664, 20
      %v1027 = vpop.permute.xlu0 %1026
      %1028 = vrot.lane.b32.xlu0 %v666, 20
      %v1029 = vpop.permute.xlu0 %1028
      %1030 = vrot.lane.b32.xlu0 %v669, 20
      %v1031 = vpop.permute.xlu0 %1030
      %1032 = vrot.lane.b32.xlu0 %v671, 20
      %v1033 = vpop.permute.xlu0 %1032
      %1034 = vrot.lane.b32.xlu0 %v674, 20
      %v1035 = vpop.permute.xlu0 %1034
      %1036 = vrot.lane.b32.xlu0 %v676, 20
      %v1037 = vpop.permute.xlu0 %1036
      %1038 = vrot.lane.b32.xlu0 %v679, 20
      %v1039 = vpop.permute.xlu0 %1038
      %1040 = vrot.lane.b32.xlu0 %v681, 20
      %v1041 = vpop.permute.xlu0 %1040
      %1042 = vrot.lane.b32.xlu0 %v684, 20
      %v1043 = vpop.permute.xlu0 %1042
      %1044 = vrot.lane.b32.xlu0 %v686, 20
      %v1045 = vpop.permute.xlu0 %1044
      %1046 = vrot.lane.b32.xlu0 %v689, 20
      %v1047 = vpop.permute.xlu0 %1046
      %1048 = vrot.lane.b32.xlu0 %v691, 20
      %v1049 = vpop.permute.xlu0 %1048
      %1050 = vrot.lane.b32.xlu0 %v694, 20
      %v1051 = vpop.permute.xlu0 %1050
      %1052 = vrot.lane.b32.xlu0 %v696, 20
      %v1053 = vpop.permute.xlu0 %1052
      %1054 = vrot.lane.b32.xlu0 %v991, 20
      %v1055 = vpop.permute.xlu0 %1054
      %1056 = vrot.lane.b32.xlu0 %v993, 20
      %v1057 = vpop.permute.xlu0 %1056
      %1090 = vrot.lane.b32.xlu0 %v386, 24
      %v1091 = vpop.permute.xlu0 %1090
      %1092 = vrot.lane.b32.xlu0 %v295, 24
      %v1093 = vpop.permute.xlu0 %1092
      %1094 = vrot.lane.b32.xlu0 %v387, 24
      %v1095 = vpop.permute.xlu0 %1094
      %1096 = vrot.lane.b32.xlu0 %v298, 24
      %v1097 = vpop.permute.xlu0 %1096
      %1098 = vrot.lane.b32.xlu0 %v388, 24
      %v1099 = vpop.permute.xlu0 %1098
      %1100 = vrot.lane.b32.xlu0 %v301, 24
      %v1101 = vpop.permute.xlu0 %1100
      %1102 = vrot.lane.b32.xlu0 %v389, 24
      %v1103 = vpop.permute.xlu0 %1102
      %1104 = vrot.lane.b32.xlu0 %v304, 24
      %v1105 = vpop.permute.xlu0 %1104
      %1106 = vrot.lane.b32.xlu0 %v390, 24
      %v1107 = vpop.permute.xlu0 %1106
      %1108 = vrot.lane.b32.xlu0 %v307, 24
      %v1109 = vpop.permute.xlu0 %1108
      %1110 = vrot.lane.b32.xlu0 %v391, 24
      %v1111 = vpop.permute.xlu0 %1110
      %1112 = vrot.lane.b32.xlu0 %v310, 24
      %v1113 = vpop.permute.xlu0 %1112
      %1114 = vrot.lane.b32.xlu0 %v392, 24
      %v1115 = vpop.permute.xlu0 %1114
      %1116 = vrot.lane.b32.xlu0 %v313, 24
      %v1117 = vpop.permute.xlu0 %1116
      %1118 = vrot.lane.b32.xlu0 %v393, 24
      %v1119 = vpop.permute.xlu0 %1118
      %1120 = vrot.lane.b32.xlu0 %v316, 24
      %v1121 = vpop.permute.xlu0 %1120
      %1122 = vrot.lane.b32.xlu0 %v394, 24
      %v1123 = vpop.permute.xlu0 %1122
      %1124 = vrot.lane.b32.xlu0 %v319, 24
      %v1125 = vpop.permute.xlu0 %1124
      %1126 = vrot.lane.b32.xlu0 %v395, 24
      %v1127 = vpop.permute.xlu0 %1126
      %1128 = vrot.lane.b32.xlu0 %v322, 24
      %v1129 = vpop.permute.xlu0 %1128
      %1130 = vrot.lane.b32.xlu0 %v396, 24
      %v1131 = vpop.permute.xlu0 %1130
      %1132 = vrot.lane.b32.xlu0 %v325, 24
      %v1133 = vpop.permute.xlu0 %1132
      %1134 = vrot.lane.b32.xlu0 %v397, 24
      %v1135 = vpop.permute.xlu0 %1134
      %1136 = vrot.lane.b32.xlu0 %v328, 24
      %v1137 = vpop.permute.xlu0 %1136
      %1138 = vrot.lane.b32.xlu0 %v398, 24
      %v1139 = vpop.permute.xlu0 %1138
      %1140 = vrot.lane.b32.xlu0 %v331, 24
      %v1141 = vpop.permute.xlu0 %1140
      %1142 = vrot.lane.b32.xlu0 %v399, 24
      %v1143 = vpop.permute.xlu0 %1142
      %1144 = vrot.lane.b32.xlu0 %v334, 24
      %v1145 = vpop.permute.xlu0 %1144
      %1146 = vrot.lane.b32.xlu0 %v400, 24
      %v1147 = vpop.permute.xlu0 %1146
      %1148 = vrot.lane.b32.xlu0 %v337, 24
      %v1149 = vpop.permute.xlu0 %1148
      %1150 = vrot.lane.b32.xlu0 0.0, 24
      %v1151 = vpop.permute.xlu0 %1150
      %1183 = vrot.lane.b32.xlu0 %v458, 28
      %v1184 = vpop.permute.xlu0 %1183
      %1185 = vrot.lane.b32.xlu0 %v460, 28
      %v1186 = vpop.permute.xlu0 %1185
      %1187 = vrot.lane.b32.xlu0 %v463, 28
      %v1188 = vpop.permute.xlu0 %1187
      %1189 = vrot.lane.b32.xlu0 %v465, 28
      %v1190 = vpop.permute.xlu0 %1189
      %1191 = vrot.lane.b32.xlu0 %v468, 28
      %v1192 = vpop.permute.xlu0 %1191
      %1193 = vrot.lane.b32.xlu0 %v470, 28
      %v1194 = vpop.permute.xlu0 %1193
      %1195 = vrot.lane.b32.xlu0 %v473, 28
      %v1196 = vpop.permute.xlu0 %1195
      %1197 = vrot.lane.b32.xlu0 %v475, 28
      %v1198 = vpop.permute.xlu0 %1197
      %1199 = vrot.lane.b32.xlu0 %v478, 28
      %v1200 = vpop.permute.xlu0 %1199
      %1201 = vrot.lane.b32.xlu0 %v480, 28
      %v1202 = vpop.permute.xlu0 %1201
      %1203 = vrot.lane.b32.xlu0 %v483, 28
      %v1204 = vpop.permute.xlu0 %1203
      %1205 = vrot.lane.b32.xlu0 %v485, 28
      %v1206 = vpop.permute.xlu0 %1205
      %1207 = vrot.lane.b32.xlu0 %v488, 28
      %v1208 = vpop.permute.xlu0 %1207
      %1209 = vrot.lane.b32.xlu0 %v490, 28
      %v1210 = vpop.permute.xlu0 %1209
      %1211 = vrot.lane.b32.xlu0 %v493, 28
      %v1212 = vpop.permute.xlu0 %1211
      %1213 = vrot.lane.b32.xlu0 %v495, 28
      %v1214 = vpop.permute.xlu0 %1213
      %1215 = vrot.lane.b32.xlu0 %v498, 28
      %v1216 = vpop.permute.xlu0 %1215
      %1217 = vrot.lane.b32.xlu0 %v500, 28
      %v1218 = vpop.permute.xlu0 %1217
      %1219 = vrot.lane.b32.xlu0 %v503, 28
      %v1220 = vpop.permute.xlu0 %1219
      %1221 = vrot.lane.b32.xlu0 %v505, 28
      %v1222 = vpop.permute.xlu0 %1221
      %1223 = vrot.lane.b32.xlu0 %v508, 28
      %v1224 = vpop.permute.xlu0 %1223
      %1225 = vrot.lane.b32.xlu0 %v510, 28
      %v1226 = vpop.permute.xlu0 %1225
      %1227 = vrot.lane.b32.xlu0 %v513, 28
      %v1228 = vpop.permute.xlu0 %1227
      %1229 = vrot.lane.b32.xlu0 %v515, 28
      %v1230 = vpop.permute.xlu0 %1229
      %1231 = vrot.lane.b32.xlu0 %v518, 28
      %v1232 = vpop.permute.xlu0 %1231
      %1233 = vrot.lane.b32.xlu0 %v520, 28
      %v1234 = vpop.permute.xlu0 %1233
      %1235 = vrot.lane.b32.xlu0 %v523, 28
      %v1236 = vpop.permute.xlu0 %1235
      %1237 = vrot.lane.b32.xlu0 %v525, 28
      %v1238 = vpop.permute.xlu0 %1237
      %1239 = vrot.lane.b32.xlu0 %v890, 28
      %v1240 = vpop.permute.xlu0 %1239
      %1241 = vrot.lane.b32.xlu0 %v892, 28
      %v1242 = vpop.permute.xlu0 %1241
      %1243 = vrot.lane.b32.xlu0 %v450, 28
      %v1244 = vpop.permute.xlu0 %1243
      %1276 = vrot.lane.b32.xlu0 %v629, 32
      %v1277 = vpop.permute.xlu0 %1276
      %1278 = vrot.lane.b32.xlu0 %v631, 32
      %v1279 = vpop.permute.xlu0 %1278
      %1280 = vrot.lane.b32.xlu0 %v634, 32
      %v1281 = vpop.permute.xlu0 %1280
      %1282 = vrot.lane.b32.xlu0 %v636, 32
      %v1283 = vpop.permute.xlu0 %1282
      %1284 = vrot.lane.b32.xlu0 %v639, 32
      %v1285 = vpop.permute.xlu0 %1284
      %1286 = vrot.lane.b32.xlu0 %v641, 32
      %v1287 = vpop.permute.xlu0 %1286
      %1288 = vrot.lane.b32.xlu0 %v644, 32
      %v1289 = vpop.permute.xlu0 %1288
      %1290 = vrot.lane.b32.xlu0 %v646, 32
      %v1291 = vpop.permute.xlu0 %1290
      %1292 = vrot.lane.b32.xlu0 %v649, 32
      %v1293 = vpop.permute.xlu0 %1292
      %1294 = vrot.lane.b32.xlu0 %v651, 32
      %v1295 = vpop.permute.xlu0 %1294
      %1296 = vrot.lane.b32.xlu0 %v654, 32
      %v1297 = vpop.permute.xlu0 %1296
      %1298 = vrot.lane.b32.xlu0 %v656, 32
      %v1299 = vpop.permute.xlu0 %1298
      %1300 = vrot.lane.b32.xlu0 %v659, 32
      %v1301 = vpop.permute.xlu0 %1300
      %1302 = vrot.lane.b32.xlu0 %v661, 32
      %v1303 = vpop.permute.xlu0 %1302
      %1304 = vrot.lane.b32.xlu0 %v664, 32
      %v1305 = vpop.permute.xlu0 %1304
      %1306 = vrot.lane.b32.xlu0 %v666, 32
      %v1307 = vpop.permute.xlu0 %1306
      %1308 = vrot.lane.b32.xlu0 %v669, 32
      %v1309 = vpop.permute.xlu0 %1308
      %1310 = vrot.lane.b32.xlu0 %v671, 32
      %v1311 = vpop.permute.xlu0 %1310
      %1312 = vrot.lane.b32.xlu0 %v674, 32
      %v1313 = vpop.permute.xlu0 %1312
      %1314 = vrot.lane.b32.xlu0 %v676, 32
      %v1315 = vpop.permute.xlu0 %1314
      %1316 = vrot.lane.b32.xlu0 %v679, 32
      %v1317 = vpop.permute.xlu0 %1316
      %1318 = vrot.lane.b32.xlu0 %v681, 32
      %v1319 = vpop.permute.xlu0 %1318
      %1320 = vrot.lane.b32.xlu0 %v684, 32
      %v1321 = vpop.permute.xlu0 %1320
      %1322 = vrot.lane.b32.xlu0 %v686, 32
      %v1323 = vpop.permute.xlu0 %1322
      %1324 = vrot.lane.b32.xlu0 %v689, 32
      %v1325 = vpop.permute.xlu0 %1324
      %1326 = vrot.lane.b32.xlu0 %v691, 32
      %v1327 = vpop.permute.xlu0 %1326
      %1328 = vrot.lane.b32.xlu0 %v694, 32
      %v1329 = vpop.permute.xlu0 %1328
      %1330 = vrot.lane.b32.xlu0 %v696, 32
      %v1331 = vpop.permute.xlu0 %1330
      %1332 = vrot.lane.b32.xlu0 %v991, 32
      %v1333 = vpop.permute.xlu0 %1332
      %1334 = vrot.lane.b32.xlu0 %v993, 32
      %v1335 = vpop.permute.xlu0 %1334
      %1336 = vrot.lane.b32.xlu0 %v621, 32
      %v1337 = vpop.permute.xlu0 %1336
      %vm1369 = vcmask 31744
      %v1370 = vsel %vm1369, 0.0, %v527
      %v1371 = vsel %vm1369, %v385, %v529
      %v1372 = vsel %vm1369, %v292, %v531
      %v1373 = vsel %vm1369, %v386, %v533
      %v1374 = vsel %vm1369, %v295, %v535
      %v1375 = vsel %vm1369, %v387, %v537
      %v1376 = vsel %vm1369, %v298, %v539
      %v1377 = vsel %vm1369, %v388, %v541
      %v1378 = vsel %vm1369, %v301, %v543
      %v1379 = vsel %vm1369, %v389, %v545
      %v1380 = vsel %vm1369, %v304, %v547
      %v1381 = vsel %vm1369, %v390, %v549
      %v1382 = vsel %vm1369, %v307, %v551
      %v1383 = vsel %vm1369, %v391, %v553
      %v1384 = vsel %vm1369, %v310, %v555
      %v1385 = vsel %vm1369, %v392, %v557
      %v1386 = vsel %vm1369, %v313, %v559
      %v1387 = vsel %vm1369, %v393, %v561
      %v1388 = vsel %vm1369, %v316, %v563
      %v1389 = vsel %vm1369, %v394, %v565
      %v1390 = vsel %vm1369, %v319, %v567
      %v1391 = vsel %vm1369, %v395, %v569
      %v1392 = vsel %vm1369, %v322, %v571
      %v1393 = vsel %vm1369, %v396, %v573
      %v1394 = vsel %vm1369, %v325, %v575
      %v1395 = vsel %vm1369, %v397, %v577
      %v1396 = vsel %vm1369, %v328, %v579
      %v1397 = vsel %vm1369, %v398, %v581
      %v1398 = vsel %vm1369, %v331, %v583
      %v1399 = vsel %vm1369, %v399, %v585
      %v1400 = vsel %vm1369, %v334, %v587
      %vm1401 = vcmask 64512
      %v1402 = vsel %vm1401, %v1370, %v698
      %v1403 = vsel %vm1401, %v1371, %v700
      %v1404 = vsel %vm1401, %v1372, %v702
      %v1405 = vsel %vm1401, %v1373, %v704
      %v1406 = vsel %vm1401, %v1374, %v706
      %v1407 = vsel %vm1401, %v1375, %v708
      %v1408 = vsel %vm1401, %v1376, %v710
      %v1409 = vsel %vm1401, %v1377, %v712
      %v1410 = vsel %vm1401, %v1378, %v714
      %v1411 = vsel %vm1401, %v1379, %v716
      %v1412 = vsel %vm1401, %v1380, %v718
      %v1413 = vsel %vm1401, %v1381, %v720
      %v1414 = vsel %vm1401, %v1382, %v722
      %v1415 = vsel %vm1401, %v1383, %v724
      %v1416 = vsel %vm1401, %v1384, %v726
      %v1417 = vsel %vm1401, %v1385, %v728
      %v1418 = vsel %vm1401, %v1386, %v730
      %v1419 = vsel %vm1401, %v1387, %v732
      %v1420 = vsel %vm1401, %v1388, %v734
      %v1421 = vsel %vm1401, %v1389, %v736
      %v1422 = vsel %vm1401, %v1390, %v738
      %v1423 = vsel %vm1401, %v1391, %v740
      %v1424 = vsel %vm1401, %v1392, %v742
      %v1425 = vsel %vm1401, %v1393, %v744
      %v1426 = vsel %vm1401, %v1394, %v746
      %v1427 = vsel %vm1401, %v1395, %v748
      %v1428 = vsel %vm1401, %v1396, %v750
      %v1429 = vsel %vm1401, %v1397, %v752
      %v1430 = vsel %vm1401, %v1398, %v754
      %v1431 = vsel %vm1401, %v1399, %v756
      %v1432 = vsel %vm1401, %v1400, %v758
      %vm1433 = vcmask 97280
      %v1434 = vsel %vm1433, %v1402, %v792
      %v1435 = vsel %vm1433, %v1402, %v794
      %v1436 = vsel %vm1433, %v1403, %v796
      %v1437 = vsel %vm1433, %v1404, %v798
      %v1438 = vsel %vm1433, %v1405, %v800
      %v1439 = vsel %vm1433, %v1406, %v802
      %v1440 = vsel %vm1433, %v1407, %v804
      %v1441 = vsel %vm1433, %v1408, %v806
      %v1442 = vsel %vm1433, %v1409, %v808
      %v1443 = vsel %vm1433, %v1410, %v810
      %v1444 = vsel %vm1433, %v1411, %v812
      %v1445 = vsel %vm1433, %v1412, %v814
      %v1446 = vsel %vm1433, %v1413, %v816
      %v1447 = vsel %vm1433, %v1414, %v818
      %v1448 = vsel %vm1433, %v1415, %v820
      %v1449 = vsel %vm1433, %v1416, %v822
      %v1450 = vsel %vm1433, %v1417, %v824
      %v1451 = vsel %vm1433, %v1418, %v826
      %v1452 = vsel %vm1433, %v1419, %v828
      %v1453 = vsel %vm1433, %v1420, %v830
      %v1454 = vsel %vm1433, %v1421, %v832
      %v1455 = vsel %vm1433, %v1422, %v834
      %v1456 = vsel %vm1433, %v1423, %v836
      %v1457 = vsel %vm1433, %v1424, %v838
      %v1458 = vsel %vm1433, %v1425, %v840
      %v1459 = vsel %vm1433, %v1426, %v842
      %v1460 = vsel %vm1433, %v1427, %v844
      %v1461 = vsel %vm1433, %v1428, %v846
      %v1462 = vsel %vm1433, %v1429, %v848
      %v1463 = vsel %vm1433, %v1430, %v850
      %v1464 = vsel %vm1433, %v1431, %v852
      %v1465 = vsel %vm1433, %v1432, %v854
      %vm1466 = vcmask 130048
      %v1467 = vsel %vm1466, %v1434, %v894
      %v1468 = vsel %vm1466, %v1435, %v896
      %v1469 = vsel %vm1466, %v1436, %v898
      %v1470 = vsel %vm1466, %v1437, %v900
      %v1471 = vsel %vm1466, %v1438, %v902
      %v1472 = vsel %vm1466, %v1439, %v904
      %v1473 = vsel %vm1466, %v1440, %v906
      %v1474 = vsel %vm1466, %v1441, %v908
      %v1475 = vsel %vm1466, %v1442, %v910
      %v1476 = vsel %vm1466, %v1443, %v912
      %v1477 = vsel %vm1466, %v1444, %v914
      %v1478 = vsel %vm1466, %v1445, %v916
      %v1479 = vsel %vm1466, %v1446, %v918
      %v1480 = vsel %vm1466, %v1447, %v920
      %v1481 = vsel %vm1466, %v1448, %v922
      %v1482 = vsel %vm1466, %v1449, %v924
      %v1483 = vsel %vm1466, %v1450, %v926
      %v1484 = vsel %vm1466, %v1451, %v928
      %v1485 = vsel %vm1466, %v1452, %v930
      %v1486 = vsel %vm1466, %v1453, %v932
      %v1487 = vsel %vm1466, %v1454, %v934
      %v1488 = vsel %vm1466, %v1455, %v936
      %v1489 = vsel %vm1466, %v1456, %v938
      %v1490 = vsel %vm1466, %v1457, %v940
      %v1491 = vsel %vm1466, %v1458, %v942
      %v1492 = vsel %vm1466, %v1459, %v944
      %v1493 = vsel %vm1466, %v1460, %v946
      %v1494 = vsel %vm1466, %v1461, %v948
      %v1495 = vsel %vm1466, %v1462, %v950
      %v1496 = vsel %vm1466, %v1463, %v952
      %v1497 = vsel %vm1466, %v1464, %v954
      %v1498 = vsel %vm1466, %v1465, %v956
      %vm1499 = vcmask 162816
      %v1500 = vsel %vm1499, %v1467, %v995
      %v1501 = vsel %vm1499, %v1468, %v997
      %v1502 = vsel %vm1499, %v1469, %v999
      %v1503 = vsel %vm1499, %v1470, %v1001
      %v1504 = vsel %vm1499, %v1471, %v1003
      %v1505 = vsel %vm1499, %v1472, %v1005
      %v1506 = vsel %vm1499, %v1473, %v1007
      %v1507 = vsel %vm1499, %v1474, %v1009
      %v1508 = vsel %vm1499, %v1475, %v1011
      %v1509 = vsel %vm1499, %v1476, %v1013
      %v1510 = vsel %vm1499, %v1477, %v1015
      %v1511 = vsel %vm1499, %v1478, %v1017
      %v1512 = vsel %vm1499, %v1479, %v1019
      %v1513 = vsel %vm1499, %v1480, %v1021
      %v1514 = vsel %vm1499, %v1481, %v1023
      %v1515 = vsel %vm1499, %v1482, %v1025
      %v1516 = vsel %vm1499, %v1483, %v1027
      %v1517 = vsel %vm1499, %v1484, %v1029
      %v1518 = vsel %vm1499, %v1485, %v1031
      %v1519 = vsel %vm1499, %v1486, %v1033
      %v1520 = vsel %vm1499, %v1487, %v1035
      %v1521 = vsel %vm1499, %v1488, %v1037
      %v1522 = vsel %vm1499, %v1489, %v1039
      %v1523 = vsel %vm1499, %v1490, %v1041
      %v1524 = vsel %vm1499, %v1491, %v1043
      %v1525 = vsel %vm1499, %v1492, %v1045
      %v1526 = vsel %vm1499, %v1493, %v1047
      %v1527 = vsel %vm1499, %v1494, %v1049
      %v1528 = vsel %vm1499, %v1495, %v1051
      %v1529 = vsel %vm1499, %v1496, %v1053
      %v1530 = vsel %vm1499, %v1497, %v1055
      %v1531 = vsel %vm1499, %v1498, %v1057
      %vm1532 = vcmask 195584
      %v1533 = vsel %vm1532, %v1500, %v1091
      %v1534 = vsel %vm1532, %v1501, %v1093
      %v1535 = vsel %vm1532, %v1502, %v1095
      %v1536 = vsel %vm1532, %v1503, %v1097
      %v1537 = vsel %vm1532, %v1504, %v1099
      %v1538 = vsel %vm1532, %v1505, %v1101
      %v1539 = vsel %vm1532, %v1506, %v1103
      %v1540 = vsel %vm1532, %v1507, %v1105
      %v1541 = vsel %vm1532, %v1508, %v1107
      %v1542 = vsel %vm1532, %v1509, %v1109
      %v1543 = vsel %vm1532, %v1510, %v1111
      %v1544 = vsel %vm1532, %v1511, %v1113
      %v1545 = vsel %vm1532, %v1512, %v1115
      %v1546 = vsel %vm1532, %v1513, %v1117
      %v1547 = vsel %vm1532, %v1514, %v1119
      %v1548 = vsel %vm1532, %v1515, %v1121
      %v1549 = vsel %vm1532, %v1516, %v1123
      %v1550 = vsel %vm1532, %v1517, %v1125
      %v1551 = vsel %vm1532, %v1518, %v1127
      %v1552 = vsel %vm1532, %v1519, %v1129
      %v1553 = vsel %vm1532, %v1520, %v1131
      %v1554 = vsel %vm1532, %v1521, %v1133
      %v1555 = vsel %vm1532, %v1522, %v1135
      %v1556 = vsel %vm1532, %v1523, %v1137
      %v1557 = vsel %vm1532, %v1524, %v1139
      %v1558 = vsel %vm1532, %v1525, %v1141
      %v1559 = vsel %vm1532, %v1526, %v1143
      %v1560 = vsel %vm1532, %v1527, %v1145
      %v1561 = vsel %vm1532, %v1528, %v1147
      %v1562 = vsel %vm1532, %v1529, %v1149
      %v1563 = vsel %vm1532, %v1530, %v1151
      %v1564 = vsel %vm1532, %v1531, %v1151
      %vm1565 = vcmask 228352
      %v1566 = vsel %vm1565, %v1533, %v1184
      %v1567 = vsel %vm1565, %v1534, %v1186
      %v1568 = vsel %vm1565, %v1535, %v1188
      %v1569 = vsel %vm1565, %v1536, %v1190
      %v1570 = vsel %vm1565, %v1537, %v1192
      %v1571 = vsel %vm1565, %v1538, %v1194
      %v1572 = vsel %vm1565, %v1539, %v1196
      %v1573 = vsel %vm1565, %v1540, %v1198
      %v1574 = vsel %vm1565, %v1541, %v1200
      %v1575 = vsel %vm1565, %v1542, %v1202
      %v1576 = vsel %vm1565, %v1543, %v1204
      %v1577 = vsel %vm1565, %v1544, %v1206
      %v1578 = vsel %vm1565, %v1545, %v1208
      %v1579 = vsel %vm1565, %v1546, %v1210
      %v1580 = vsel %vm1565, %v1547, %v1212
      %v1581 = vsel %vm1565, %v1548, %v1214
      %v1582 = vsel %vm1565, %v1549, %v1216
      %v1583 = vsel %vm1565, %v1550, %v1218
      %v1584 = vsel %vm1565, %v1551, %v1220
      %v1585 = vsel %vm1565, %v1552, %v1222
      %v1586 = vsel %vm1565, %v1553, %v1224
      %v1587 = vsel %vm1565, %v1554, %v1226
      %v1588 = vsel %vm1565, %v1555, %v1228
      %v1589 = vsel %vm1565, %v1556, %v1230
      %v1590 = vsel %vm1565, %v1557, %v1232
      %v1591 = vsel %vm1565, %v1558, %v1234
      %v1592 = vsel %vm1565, %v1559, %v1236
      %v1593 = vsel %vm1565, %v1560, %v1238
      %v1594 = vsel %vm1565, %v1561, %v1240
      %v1595 = vsel %vm1565, %v1562, %v1242
      %v1596 = vsel %vm1565, %v1563, %v1244
      %v1597 = vsel %vm1565, %v1564, %v1244
      %vm1598 = vcmask 261120
      %v1599 = vsel %vm1598, %v1566, %v1277
      %v1600 = vsel %vm1598, %v1567, %v1279
      %v1601 = vsel %vm1598, %v1568, %v1281
      %v1602 = vsel %vm1598, %v1569, %v1283
      %v1603 = vsel %vm1598, %v1570, %v1285
      %v1604 = vsel %vm1598, %v1571, %v1287
      %v1605 = vsel %vm1598, %v1572, %v1289
      %v1606 = vsel %vm1598, %v1573, %v1291
      %v1607 = vsel %vm1598, %v1574, %v1293
      %v1608 = vsel %vm1598, %v1575, %v1295
      %v1609 = vsel %vm1598, %v1576, %v1297
      %v1610 = vsel %vm1598, %v1577, %v1299
      %v1611 = vsel %vm1598, %v1578, %v1301
      %v1612 = vsel %vm1598, %v1579, %v1303
      %v1613 = vsel %vm1598, %v1580, %v1305
      %v1614 = vsel %vm1598, %v1581, %v1307
      %v1615 = vsel %vm1598, %v1582, %v1309
      %v1616 = vsel %vm1598, %v1583, %v1311
      %v1617 = vsel %vm1598, %v1584, %v1313
      %v1618 = vsel %vm1598, %v1585, %v1315
      %v1619 = vsel %vm1598, %v1586, %v1317
      %v1620 = vsel %vm1598, %v1587, %v1319
      %v1621 = vsel %vm1598, %v1588, %v1321
      %v1622 = vsel %vm1598, %v1589, %v1323
      %v1623 = vsel %vm1598, %v1590, %v1325
      %v1624 = vsel %vm1598, %v1591, %v1327
      %v1625 = vsel %vm1598, %v1592, %v1329
      %v1626 = vsel %vm1598, %v1593, %v1331
      %v1627 = vsel %vm1598, %v1594, %v1333
      %v1628 = vsel %vm1598, %v1595, %v1335
      %v1629 = vsel %vm1598, %v1596, %v1337
      %v1630 = vsel %vm1598, %v1597, %v1337
      %v1631 = vld [vmem:[%s1] sm:$0xff]
      %v1632 = vld [vmem:[%s1 + $0x8] sm:$0xff]
      %v1633 = vld [vmem:[%s1 + $0x10] sm:$0xff]
      %v1634 = vld [vmem:[%s1 + $0x18] sm:$0xff]
      %v1635 = vld [vmem:[%s1 + $0x20] sm:$0xf]
      %vm1636 = vcmask 293888
      %v1638 = vsel %vm1636, %v1599, 0
      %v1641 = vsel %vm1636, %v1600, 0
      %v1644 = vsel %vm1636, %v1601, 0
      %v1647 = vsel %vm1636, %v1602, 0
      %v1650 = vsel %vm1636, %v1603, 0
      %v1653 = vsel %vm1636, %v1604, 0
      %v1656 = vsel %vm1636, %v1605, 0
      %v1659 = vsel %vm1636, %v1606, 0
      %v1662 = vsel %vm1636, %v1607, 0
      %v1665 = vsel %vm1636, %v1608, 0
      %v1668 = vsel %vm1636, %v1609, 0
      %v1671 = vsel %vm1636, %v1610, 0
      %v1674 = vsel %vm1636, %v1611, 0
      %v1677 = vsel %vm1636, %v1612, 0
      %v1680 = vsel %vm1636, %v1613, 0
      %v1683 = vsel %vm1636, %v1614, 0
      %v1686 = vsel %vm1636, %v1615, 0
      %v1689 = vsel %vm1636, %v1616, 0
      %v1692 = vsel %vm1636, %v1617, 0
      %v1695 = vsel %vm1636, %v1618, 0
      %v1698 = vsel %vm1636, %v1619, 0
      %v1701 = vsel %vm1636, %v1620, 0
      %v1704 = vsel %vm1636, %v1621, 0
      %v1707 = vsel %vm1636, %v1622, 0
      %v1710 = vsel %vm1636, %v1623, 0
      %v1713 = vsel %vm1636, %v1624, 0
      %v1716 = vsel %vm1636, %v1625, 0
      %v1719 = vsel %vm1636, %v1626, 0
      %v1722 = vsel %vm1636, %v1627, 0
      %v1725 = vsel %vm1636, %v1628, 0
      %v1728 = vsel %vm1636, %v1629, 0
      %v1731 = vsel %vm1636, %v1630, 0
      %vm1733 = vcmask 1043456
      %v1735 = vsel %vm1733, %v1635, 0
      %1737 = vmatprep.subr.mxu0 0.0
      %1738 = vmatpush1.msra.mxu0 %v1631
      %1739 = vmatprep.subr.mxu0 0.0
      %1740 = vmatpush1.msra.mxu0 %v1632
      %1741 = vmatprep.subr.mxu0 0.0
      %1742 = vmatpush1.msra.mxu0 %v1633
      %1743 = vmatprep.subr.mxu0 0.0
      %1744 = vmatpush1.msra.mxu0 %v1634
      %1745 = vmatprep.subr.mxu0 0.0
      %1746 = vmatpush1.msra.mxu0 %v1735
      %1747 = vmatprep.subr.mxu0 0.0
      %1748 = vmatpush1.msra.mxu0 0.0
      %1749 = vmatprep.subr.mxu0 0.0
      %1750 = vmatpush1.msra.mxu0 0.0
      %1751 = vmatprep.subr.mxu0 0.0
      %1752 = vmatpush1.msra.mxu0 0.0
      %1753 = vmatprep.subr.mxu0 0.0
      %1754 = vmatpush1.msra.mxu0 0.0
      %1755 = vmatprep.subr.mxu0 0.0
      %1756 = vmatpush1.msra.mxu0 0.0
      %1757 = vmatprep.subr.mxu0 0.0
      %1758 = vmatpush1.msra.mxu0 0.0
      %1759 = vmatprep.subr.mxu0 0.0
      %1760 = vmatpush1.msra.mxu0 0.0
      %1761 = vmatprep.subr.mxu0 0.0
      %1762 = vmatpush1.msra.mxu0 0.0
      %1763 = vmatprep.subr.mxu0 0.0
      %1764 = vmatpush1.msra.mxu0 0.0
      %1765 = vmatprep.subr.mxu0 0.0
      %1766 = vmatpush1.msra.mxu0 0.0
      %1767 = vmatprep.subr.mxu0 0.0
      %1768 = vmatpush1.msra.mxu0 0.0
      %1769 = vmatprep.subr.mxu0 0.0
      %1770 = vmatpush1.msra.mxu0 0.0
      %1771 = vmatprep.subr.mxu0 0.0
      %1772 = vmatpush1.msra.mxu0 0.0
      %1773 = vmatprep.subr.mxu0 0.0
      %1774 = vmatpush1.msra.mxu0 0.0
      %1775 = vmatprep.subr.mxu0 0.0
      %1776 = vmatpush1.msra.mxu0 0.0
      %1777 = vmatprep.subr.mxu0 0.0
      %1778 = vmatpush1.msra.mxu0 0.0
      %1779 = vmatprep.subr.mxu0 0.0
      %1780 = vmatpush1.msra.mxu0 0.0
      %1781 = vmatprep.subr.mxu0 0.0
      %1782 = vmatpush1.msra.mxu0 0.0
      %1783 = vmatprep.subr.mxu0 0.0
      %1784 = vmatpush1.msra.mxu0 0.0
      %1785 = vmatprep.subr.mxu0 0.0
      %1786 = vmatpush1.msra.mxu0 0.0
      %1787 = vmatprep.subr.mxu0 0.0
      %1788 = vmatpush1.msra.mxu0 0.0
      %1789 = vmatprep.subr.mxu0 0.0
      %1790 = vmatpush1.msra.mxu0 0.0
      %1791 = vmatprep.subr.mxu0 0.0
      %1792 = vmatpush1.msra.mxu0 0.0
      %1793 = vmatprep.subr.mxu0 0.0
      %1794 = vmatpush1.msra.mxu0 0.0
      %1795 = vmatprep.subr.mxu0 0.0
      %1796 = vmatpush1.msra.mxu0 0.0
      %1797 = vmatprep.subr.mxu0 0.0
      %1798 = vmatpush1.msra.mxu0 0.0
      %1799 = vmatprep.subr.mxu0 0.0
      %1800 = vmatpush1.msra.mxu0 0.0
      %1801 = vmatprep.mubr.f32.mxu0 0.0
      %1802 = vmatmul.mubr.f32.gmra.mrb[0].mxu0 %v1638
      %v1803 = vpop.f32.mrb[0].mxu0
      %v1804 = vadd.f32 0.0, %v1803
      %v1805 = vpop.f32.mrb[0].mxu0
      %1806 = vmatprep.mubr.f32.mxu0 0.0
      %1807 = vmatmul.mubr.f32.gmra.mrb[0].mxu0 %v1641
      %v1808 = vpop.f32.mrb[0].mxu0
      %v1809 = vadd.f32 0.0, %v1808
      %v1810 = vpop.f32.mrb[0].mxu0
      %1811 = vmatprep.mubr.f32.mxu0 0.0
      %1812 = vmatmul.mubr.f32.gmra.mrb[0].mxu0 %v1644
      %v1813 = vpop.f32.mrb[0].mxu0
      %v1814 = vadd.f32 0.0, %v1813
      %v1815 = vpop.f32.mrb[0].mxu0
      %1816 = vmatprep.mubr.f32.mxu0 0.0
      %1817 = vmatmul.mubr.f32.gmra.mrb[0].mxu0 %v1647
      %v1818 = vpop.f32.mrb[0].mxu0
      %v1819 = vadd.f32 0.0, %v1818
      %v1820 = vpop.f32.mrb[0].mxu0
      %1821 = vmatprep.mubr.f32.mxu0 0.0
      %1822 = vmatmul.mubr.f32.gmra.mrb[0].mxu0 %v1650
      %v1823 = vpop.f32.mrb[0].mxu0
      %v1824 = vadd.f32 0.0, %v1823
      %v1825 = vpop.f32.mrb[0].mxu0
      %1826 = vmatprep.mubr.f32.mxu0 0.0
      %1827 = vmatmul.mubr.f32.gmra.mrb[0].mxu0 %v1653
      %v1828 = vpop.f32.mrb[0].mxu0
      %v1829 = vadd.f32 0.0, %v1828
      %v1830 = vpop.f32.mrb[0].mxu0
      %1831 = vmatprep.mubr.f32.mxu0 0.0
      %1832 = vmatmul.mubr.f32.gmra.mrb[0].mxu0 %v1656
      %v1833 = vpop.f32.mrb[0].mxu0
      %v1834 = vadd.f32 0.0, %v1833
      %v1835 = vpop.f32.mrb[0].mxu0
      %1836 = vmatprep.mubr.f32.mxu0 0.0
      %1837 = vmatmul.mubr.f32.gmra.mrb[0].mxu0 %v1659
      %v1838 = vpop.f32.mrb[0].mxu0
      %v1839 = vadd.f32 0.0, %v1838
      %v1840 = vpop.f32.mrb[0].mxu0
      %1841 = vmatprep.mubr.f32.mxu0 0.0
      %1842 = vmatmul.mubr.f32.gmra.mrb[0].mxu0 %v1662
      %v1843 = vpop.f32.mrb[0].mxu0
      %v1844 = vadd.f32 0.0, %v1843
      %v1845 = vpop.f32.mrb[0].mxu0
      %1846 = vmatprep.mubr.f32.mxu0 0.0
      %1847 = vmatmul.mubr.f32.gmra.mrb[0].mxu0 %v1665
      %v1848 = vpop.f32.mrb[0].mxu0
      %v1849 = vadd.f32 0.0, %v1848
      %v1850 = vpop.f32.mrb[0].mxu0
      %1851 = vmatprep.mubr.f32.mxu0 0.0
      %1852 = vmatmul.mubr.f32.gmra.mrb[0].mxu0 %v1668
      %v1853 = vpop.f32.mrb[0].mxu0
      %v1854 = vadd.f32 0.0, %v1853
      %v1855 = vpop.f32.mrb[0].mxu0
      %1856 = vmatprep.mubr.f32.mxu0 0.0
      %1857 = vmatmul.mubr.f32.gmra.mrb[0].mxu0 %v1671
      %v1858 = vpop.f32.mrb[0].mxu0
      %v1859 = vadd.f32 0.0, %v1858
      %v1860 = vpop.f32.mrb[0].mxu0
      %1861 = vmatprep.mubr.f32.mxu0 0.0
      %1862 = vmatmul.mubr.f32.gmra.mrb[0].mxu0 %v1674
      %v1863 = vpop.f32.mrb[0].mxu0
      %v1864 = vadd.f32 0.0, %v1863
      %v1865 = vpop.f32.mrb[0].mxu0
      %1866 = vmatprep.mubr.f32.mxu0 0.0
      %1867 = vmatmul.mubr.f32.gmra.mrb[0].mxu0 %v1677
      %v1868 = vpop.f32.mrb[0].mxu0
      %v1869 = vadd.f32 0.0, %v1868
      %v1870 = vpop.f32.mrb[0].mxu0
      %1871 = vmatprep.mubr.f32.mxu0 0.0
      %1872 = vmatmul.mubr.f32.gmra.mrb[0].mxu0 %v1680
      %v1873 = vpop.f32.mrb[0].mxu0
      %v1874 = vadd.f32 0.0, %v1873
      %v1875 = vpop.f32.mrb[0].mxu0
      %1876 = vmatprep.mubr.f32.mxu0 0.0
      %1877 = vmatmul.mubr.f32.gmra.mrb[0].mxu0 %v1683
      %v1878 = vpop.f32.mrb[0].mxu0
      %v1879 = vadd.f32 0.0, %v1878
      %v1880 = vpop.f32.mrb[0].mxu0
      %1881 = vmatprep.mubr.f32.mxu0 0.0
      %1882 = vmatmul.mubr.f32.gmra.mrb[0].mxu0 %v1686
      %v1883 = vpop.f32.mrb[0].mxu0
      %v1884 = vadd.f32 0.0, %v1883
      %v1885 = vpop.f32.mrb[0].mxu0
      %1886 = vmatprep.mubr.f32.mxu0 0.0
      %1887 = vmatmul.mubr.f32.gmra.mrb[0].mxu0 %v1689
      %v1888 = vpop.f32.mrb[0].mxu0
      %v1889 = vadd.f32 0.0, %v1888
      %v1890 = vpop.f32.mrb[0].mxu0
      %1891 = vmatprep.mubr.f32.mxu0 0.0
      %1892 = vmatmul.mubr.f32.gmra.mrb[0].mxu0 %v1692
      %v1893 = vpop.f32.mrb[0].mxu0
      %v1894 = vadd.f32 0.0, %v1893
      %v1895 = vpop.f32.mrb[0].mxu0
      %1896 = vmatprep.mubr.f32.mxu0 0.0
      %1897 = vmatmul.mubr.f32.gmra.mrb[0].mxu0 %v1695
      %v1898 = vpop.f32.mrb[0].mxu0
      %v1899 = vadd.f32 0.0, %v1898
      %v1900 = vpop.f32.mrb[0].mxu0
      %1901 = vmatprep.mubr.f32.mxu0 0.0
      %1902 = vmatmul.mubr.f32.gmra.mrb[0].mxu0 %v1698
      %v1903 = vpop.f32.mrb[0].mxu0
      %v1904 = vadd.f32 0.0, %v1903
      %v1905 = vpop.f32.mrb[0].mxu0
      %1906 = vmatprep.mubr.f32.mxu0 0.0
      %1907 = vmatmul.mubr.f32.gmra.mrb[0].mxu0 %v1701
      %v1908 = vpop.f32.mrb[0].mxu0
      %v1909 = vadd.f32 0.0, %v1908
      %v1910 = vpop.f32.mrb[0].mxu0
      %1911 = vmatprep.mubr.f32.mxu0 0.0
      %1912 = vmatmul.mubr.f32.gmra.mrb[0].mxu0 %v1704
      %v1913 = vpop.f32.mrb[0].mxu0
      %v1914 = vadd.f32 0.0, %v1913
      %v1915 = vpop.f32.mrb[0].mxu0
      %1916 = vmatprep.mubr.f32.mxu0 0.0
      %1917 = vmatmul.mubr.f32.gmra.mrb[0].mxu0 %v1707
      %v1918 = vpop.f32.mrb[0].mxu0
      %v1919 = vadd.f32 0.0, %v1918
      %v1920 = vpop.f32.mrb[0].mxu0
      %1921 = vmatprep.mubr.f32.mxu0 0.0
      %1922 = vmatmul.mubr.f32.gmra.mrb[0].mxu0 %v1710
      %v1923 = vpop.f32.mrb[0].mxu0
      %v1924 = vadd.f32 0.0, %v1923
      %v1925 = vpop.f32.mrb[0].mxu0
      %1926 = vmatprep.mubr.f32.mxu0 0.0
      %1927 = vmatmul.mubr.f32.gmra.mrb[0].mxu0 %v1713
      %v1928 = vpop.f32.mrb[0].mxu0
      %v1929 = vadd.f32 0.0, %v1928
      %v1930 = vpop.f32.mrb[0].mxu0
      %1931 = vmatprep.mubr.f32.mxu0 0.0
      %1932 = vmatmul.mubr.f32.gmra.mrb[0].mxu0 %v1716
      %v1933 = vpop.f32.mrb[0].mxu0
      %v1934 = vadd.f32 0.0, %v1933
      %v1935 = vpop.f32.mrb[0].mxu0
      %1936 = vmatprep.mubr.f32.mxu0 0.0
      %1937 = vmatmul.mubr.f32.gmra.mrb[0].mxu0 %v1719
      %v1938 = vpop.f32.mrb[0].mxu0
      %v1939 = vadd.f32 0.0, %v1938
      %v1940 = vpop.f32.mrb[0].mxu0
      %1941 = vmatprep.mubr.f32.mxu0 0.0
      %1942 = vmatmul.mubr.f32.gmra.mrb[0].mxu0 %v1722
      %v1943 = vpop.f32.mrb[0].mxu0
      %v1944 = vadd.f32 0.0, %v1943
      %v1945 = vpop.f32.mrb[0].mxu0
      %1946 = vmatprep.mubr.f32.mxu0 0.0
      %1947 = vmatmul.mubr.f32.gmra.mrb[0].mxu0 %v1725
      %v1948 = vpop.f32.mrb[0].mxu0
      %v1949 = vadd.f32 0.0, %v1948
      %v1950 = vpop.f32.mrb[0].mxu0
      %1951 = vmatprep.mubr.f32.mxu0 0.0
      %1952 = vmatmul.mubr.f32.gmra.mrb[0].mxu0 %v1728
      %v1953 = vpop.f32.mrb[0].mxu0
      %v1954 = vadd.f32 0.0, %v1953
      %v1955 = vpop.f32.mrb[0].mxu0
      %1956 = vmatprep.mubr.f32.mxu0 0.0
      %1957 = vmatmul.mubr.f32.gmra.mrb[0].mxu0 %v1731
      %v1958 = vpop.f32.mrb[0].mxu0
      %v1959 = vadd.f32 0.0, %v1958
      %v1960 = vpop.f32.mrb[0].mxu0
      %1961 = vdwg.mxu0
      %v1962 = vld [vmem:[%s2] sm:$0x1]
      %v1964 = vlaneseq
      %v1965 = vshrl.u32 %v1964, 7
      %v1966 = vsub.s32 0, %v1965
      %v1967 = vrot.slane %v1962, %v1966
      %v1969 = vadd.f32 %v1804, %v1967
      %v1970 = vadd.f32 %v1809, %v1967
      %v1971 = vadd.f32 %v1814, %v1967
      %v1972 = vadd.f32 %v1819, %v1967
      %v1973 = vadd.f32 %v1824, %v1967
      %v1974 = vadd.f32 %v1829, %v1967
      %v1975 = vadd.f32 %v1834, %v1967
      %v1976 = vadd.f32 %v1839, %v1967
      %v1977 = vadd.f32 %v1844, %v1967
      %v1978 = vadd.f32 %v1849, %v1967
      %v1979 = vadd.f32 %v1854, %v1967
      %v1980 = vadd.f32 %v1859, %v1967
      %v1981 = vadd.f32 %v1864, %v1967
      %v1982 = vadd.f32 %v1869, %v1967
      %v1983 = vadd.f32 %v1874, %v1967
      %v1984 = vadd.f32 %v1879, %v1967
      %v1985 = vadd.f32 %v1884, %v1967
      %v1986 = vadd.f32 %v1889, %v1967
      %v1987 = vadd.f32 %v1894, %v1967
      %v1988 = vadd.f32 %v1899, %v1967
      %v1989 = vadd.f32 %v1904, %v1967
      %v1990 = vadd.f32 %v1909, %v1967
      %v1991 = vadd.f32 %v1914, %v1967
      %v1992 = vadd.f32 %v1919, %v1967
      %v1993 = vadd.f32 %v1924, %v1967
      %v1994 = vadd.f32 %v1929, %v1967
      %v1995 = vadd.f32 %v1934, %v1967
      %v1996 = vadd.f32 %v1939, %v1967
      %v1997 = vadd.f32 %v1944, %v1967
      %v1998 = vadd.f32 %v1949, %v1967
      %v1999 = vadd.f32 %v1954, %v1967
      %v2000 = vadd.f32 %v1959, %v1967
      %v2001 = vmax.f32 %v1969, 0.0
      %v2002 = vmax.f32 %v1970, 0.0
      %v2003 = vmax.f32 %v1971, 0.0
      %v2004 = vmax.f32 %v1972, 0.0
      %v2005 = vmax.f32 %v1973, 0.0
      %v2006 = vmax.f32 %v1974, 0.0
      %v2007 = vmax.f32 %v1975, 0.0
      %v2008 = vmax.f32 %v1976, 0.0
      %v2009 = vmax.f32 %v1977, 0.0
      %v2010 = vmax.f32 %v1978, 0.0
      %v2011 = vmax.f32 %v1979, 0.0
      %v2012 = vmax.f32 %v1980, 0.0
      %v2013 = vmax.f32 %v1981, 0.0
      %v2014 = vmax.f32 %v1982, 0.0
      %v2015 = vmax.f32 %v1983, 0.0
      %v2016 = vmax.f32 %v1984, 0.0
      %v2017 = vmax.f32 %v1985, 0.0
      %v2018 = vmax.f32 %v1986, 0.0
      %v2019 = vmax.f32 %v1987, 0.0
      %v2020 = vmax.f32 %v1988, 0.0
      %v2021 = vmax.f32 %v1989, 0.0
      %v2022 = vmax.f32 %v1990, 0.0
      %v2023 = vmax.f32 %v1991, 0.0
      %v2024 = vmax.f32 %v1992, 0.0
      %v2025 = vmax.f32 %v1993, 0.0
      %v2026 = vmax.f32 %v1994, 0.0
      %v2027 = vmax.f32 %v1995, 0.0
      %v2028 = vmax.f32 %v1996, 0.0
      %v2029 = vmax.f32 %v1997, 0.0
      %v2030 = vmax.f32 %v1998, 0.0
      %v2031 = vmax.f32 %v1999, 0.0
      %v2032 = vmax.f32 %v2000, 0.0
      %v2065 = vrot.slane %v2001, 7
      %v2066 = vrot.slane %v2002, 7
      %v2067 = vsel %vm289, %v2065, %v2066
      %v2068 = vrot.slane %v2003, 7
      %v2069 = vrot.slane %v2004, 7
      %v2070 = vsel %vm289, %v2068, %v2069
      %v2071 = vrot.slane %v2005, 7
      %v2072 = vrot.slane %v2006, 7
      %v2073 = vsel %vm289, %v2071, %v2072
      %v2074 = vrot.slane %v2007, 7
      %v2075 = vrot.slane %v2008, 7
      %v2076 = vsel %vm289, %v2074, %v2075
      %v2077 = vrot.slane %v2009, 7
      %v2078 = vrot.slane %v2010, 7
      %v2079 = vsel %vm289, %v2077, %v2078
      %v2080 = vrot.slane %v2011, 7
      %v2081 = vrot.slane %v2012, 7
      %v2082 = vsel %vm289, %v2080, %v2081
      %v2083 = vrot.slane %v2013, 7
      %v2084 = vrot.slane %v2014, 7
      %v2085 = vsel %vm289, %v2083, %v2084
      %v2086 = vrot.slane %v2015, 7
      %v2087 = vrot.slane %v2016, 7
      %v2088 = vsel %vm289, %v2086, %v2087
      %v2089 = vrot.slane %v2017, 7
      %v2090 = vrot.slane %v2018, 7
      %v2091 = vsel %vm289, %v2089, %v2090
      %v2092 = vrot.slane %v2019, 7
      %v2093 = vrot.slane %v2020, 7
      %v2094 = vsel %vm289, %v2092, %v2093
      %v2095 = vrot.slane %v2021, 7
      %v2096 = vrot.slane %v2022, 7
      %v2097 = vsel %vm289, %v2095, %v2096
      %v2098 = vrot.slane %v2023, 7
      %v2099 = vrot.slane %v2024, 7
      %v2100 = vsel %vm289, %v2098, %v2099
      %v2101 = vrot.slane %v2025, 7
      %v2102 = vrot.slane %v2026, 7
      %v2103 = vsel %vm289, %v2101, %v2102
      %v2104 = vrot.slane %v2027, 7
      %v2105 = vrot.slane %v2028, 7
      %v2106 = vsel %vm289, %v2104, %v2105
      %v2107 = vrot.slane %v2029, 7
      %v2108 = vrot.slane %v2030, 7
      %v2109 = vsel %vm289, %v2107, %v2108
      %v2110 = vrot.slane %v2031, 7
      %v2111 = vrot.slane %v2032, 7
      %v2112 = vsel %vm289, %v2110, %v2111
      %v2160 = vsel %vm289, 0.0, %v2065
      %v2161 = vsel %vm289, 0.0, %v2068
      %v2162 = vsel %vm289, 0.0, %v2071
      %v2163 = vsel %vm289, 0.0, %v2074
      %v2164 = vsel %vm289, 0.0, %v2077
      %v2165 = vsel %vm289, 0.0, %v2080
      %v2166 = vsel %vm289, 0.0, %v2083
      %v2167 = vsel %vm289, 0.0, %v2086
      %v2168 = vsel %vm289, 0.0, %v2089
      %v2169 = vsel %vm289, 0.0, %v2092
      %v2170 = vsel %vm289, 0.0, %v2095
      %v2171 = vsel %vm289, 0.0, %v2098
      %v2172 = vsel %vm289, 0.0, %v2101
      %v2173 = vsel %vm289, 0.0, %v2104
      %v2174 = vsel %vm289, 0.0, %v2107
      %v2175 = vsel %vm289, 0.0, %v2110
      %v2176 = vsel %vm289, %v2066, 0.0
      %v2177 = vsel %vm289, %v2069, 0.0
      %v2178 = vsel %vm289, %v2072, 0.0
      %v2179 = vsel %vm289, %v2075, 0.0
      %v2180 = vsel %vm289, %v2078, 0.0
      %v2181 = vsel %vm289, %v2081, 0.0
      %v2182 = vsel %vm289, %v2084, 0.0
      %v2183 = vsel %vm289, %v2087, 0.0
      %v2184 = vsel %vm289, %v2090, 0.0
      %v2185 = vsel %vm289, %v2093, 0.0
      %v2186 = vsel %vm289, %v2096, 0.0
      %v2187 = vsel %vm289, %v2099, 0.0
      %v2188 = vsel %vm289, %v2102, 0.0
      %v2189 = vsel %vm289, %v2105, 0.0
      %v2190 = vsel %vm289, %v2108, 0.0
      %v2191 = vsel %vm289, %v2111, 0.0
      %v2222 = vrot.slane %v2160, 1
      %v2223 = vrot.slane %v2067, 1
      %v2224 = vsel %vm448, %v2222, %v2223
      %v2225 = vrot.slane %v2176, 1
      %v2226 = vsel %vm448, %v2223, %v2225
      %v2227 = vrot.slane %v2161, 1
      %v2228 = vrot.slane %v2070, 1
      %v2229 = vsel %vm448, %v2227, %v2228
      %v2230 = vrot.slane %v2177, 1
      %v2231 = vsel %vm448, %v2228, %v2230
      %v2232 = vrot.slane %v2162, 1
      %v2233 = vrot.slane %v2073, 1
      %v2234 = vsel %vm448, %v2232, %v2233
      %v2235 = vrot.slane %v2178, 1
      %v2236 = vsel %vm448, %v2233, %v2235
      %v2237 = vrot.slane %v2163, 1
      %v2238 = vrot.slane %v2076, 1
      %v2239 = vsel %vm448, %v2237, %v2238
      %v2240 = vrot.slane %v2179, 1
      %v2241 = vsel %vm448, %v2238, %v2240
      %v2242 = vrot.slane %v2164, 1
      %v2243 = vrot.slane %v2079, 1
      %v2244 = vsel %vm448, %v2242, %v2243
      %v2245 = vrot.slane %v2180, 1
      %v2246 = vsel %vm448, %v2243, %v2245
      %v2247 = vrot.slane %v2165, 1
      %v2248 = vrot.slane %v2082, 1
      %v2249 = vsel %vm448, %v2247, %v2248
      %v2250 = vrot.slane %v2181, 1
      %v2251 = vsel %vm448, %v2248, %v2250
      %v2252 = vrot.slane %v2166, 1
      %v2253 = vrot.slane %v2085, 1
      %v2254 = vsel %vm448, %v2252, %v2253
      %v2255 = vrot.slane %v2182, 1
      %v2256 = vsel %vm448, %v2253, %v2255
      %v2257 = vrot.slane %v2167, 1
      %v2258 = vrot.slane %v2088, 1
      %v2259 = vsel %vm448, %v2257, %v2258
      %v2260 = vrot.slane %v2183, 1
      %v2261 = vsel %vm448, %v2258, %v2260
      %v2262 = vrot.slane %v2168, 1
      %v2263 = vrot.slane %v2091, 1
      %v2264 = vsel %vm448, %v2262, %v2263
      %v2265 = vrot.slane %v2184, 1
      %v2266 = vsel %vm448, %v2263, %v2265
      %v2267 = vrot.slane %v2169, 1
      %v2268 = vrot.slane %v2094, 1
      %v2269 = vsel %vm448, %v2267, %v2268
      %v2270 = vrot.slane %v2185, 1
      %v2271 = vsel %vm448, %v2268, %v2270
      %v2272 = vrot.slane %v2170, 1
      %v2273 = vrot.slane %v2097, 1
      %v2274 = vsel %vm448, %v2272, %v2273
      %v2275 = vrot.slane %v2186, 1
      %v2276 = vsel %vm448, %v2273, %v2275
      %v2277 = vrot.slane %v2171, 1
      %v2278 = vrot.slane %v2100, 1
      %v2279 = vsel %vm448, %v2277, %v2278
      %v2280 = vrot.slane %v2187, 1
      %v2281 = vsel %vm448, %v2278, %v2280
      %v2282 = vrot.slane %v2172, 1
      %v2283 = vrot.slane %v2103, 1
      %v2284 = vsel %vm448, %v2282, %v2283
      %v2285 = vrot.slane %v2188, 1
      %v2286 = vsel %vm448, %v2283, %v2285
      %v2287 = vrot.slane %v2173, 1
      %v2288 = vrot.slane %v2106, 1
      %v2289 = vsel %vm448, %v2287, %v2288
      %v2290 = vrot.slane %v2189, 1
      %v2291 = vsel %vm448, %v2288, %v2290
      %v2292 = vrot.slane %v2174, 1
      %v2293 = vrot.slane %v2109, 1
      %v2294 = vsel %vm448, %v2292, %v2293
      %v2295 = vrot.slane %v2190, 1
      %v2296 = vsel %vm448, %v2293, %v2295
      %2297 = vrot.lane.b32.xlu0 %v2224, 4
      %v2298 = vpop.permute.xlu0 %2297
      %2299 = vrot.lane.b32.xlu0 %v2226, 4
      %v2300 = vpop.permute.xlu0 %2299
      %2301 = vrot.lane.b32.xlu0 %v2229, 4
      %v2302 = vpop.permute.xlu0 %2301
      %2303 = vrot.lane.b32.xlu0 %v2231, 4
      %v2304 = vpop.permute.xlu0 %2303
      %2305 = vrot.lane.b32.xlu0 %v2234, 4
      %v2306 = vpop.permute.xlu0 %2305
      %2307 = vrot.lane.b32.xlu0 %v2236, 4
      %v2308 = vpop.permute.xlu0 %2307
      %2309 = vrot.lane.b32.xlu0 %v2239, 4
      %v2310 = vpop.permute.xlu0 %2309
      %2311 = vrot.lane.b32.xlu0 %v2241, 4
      %v2312 = vpop.permute.xlu0 %2311
      %2313 = vrot.lane.b32.xlu0 %v2244, 4
      %v2314 = vpop.permute.xlu0 %2313
      %2315 = vrot.lane.b32.xlu0 %v2246, 4
      %v2316 = vpop.permute.xlu0 %2315
      %2317 = vrot.lane.b32.xlu0 %v2249, 4
      %v2318 = vpop.permute.xlu0 %2317
      %2319 = vrot.lane.b32.xlu0 %v2251, 4
      %v2320 = vpop.permute.xlu0 %2319
      %2321 = vrot.lane.b32.xlu0 %v2254, 4
      %v2322 = vpop.permute.xlu0 %2321
      %2323 = vrot.lane.b32.xlu0 %v2256, 4
      %v2324 = vpop.permute.xlu0 %2323
      %2325 = vrot.lane.b32.xlu0 %v2259, 4
      %v2326 = vpop.permute.xlu0 %2325
      %2327 = vrot.lane.b32.xlu0 %v2261, 4
      %v2328 = vpop.permute.xlu0 %2327
      %2329 = vrot.lane.b32.xlu0 %v2264, 4
      %v2330 = vpop.permute.xlu0 %2329
      %2331 = vrot.lane.b32.xlu0 %v2266, 4
      %v2332 = vpop.permute.xlu0 %2331
      %2333 = vrot.lane.b32.xlu0 %v2269, 4
      %v2334 = vpop.permute.xlu0 %2333
      %2335 = vrot.lane.b32.xlu0 %v2271, 4
      %v2336 = vpop.permute.xlu0 %2335
      %2337 = vrot.lane.b32.xlu0 %v2274, 4
      %v2338 = vpop.permute.xlu0 %2337
      %2339 = vrot.lane.b32.xlu0 %v2276, 4
      %v2340 = vpop.permute.xlu0 %2339
      %2341 = vrot.lane.b32.xlu0 %v2279, 4
      %v2342 = vpop.permute.xlu0 %2341
      %2343 = vrot.lane.b32.xlu0 %v2281, 4
      %v2344 = vpop.permute.xlu0 %2343
      %2345 = vrot.lane.b32.xlu0 %v2284, 4
      %v2346 = vpop.permute.xlu0 %2345
      %2347 = vrot.lane.b32.xlu0 %v2286, 4
      %v2348 = vpop.permute.xlu0 %2347
      %2349 = vrot.lane.b32.xlu0 %v2289, 4
      %v2350 = vpop.permute.xlu0 %2349
      %2351 = vrot.lane.b32.xlu0 %v2291, 4
      %v2352 = vpop.permute.xlu0 %2351
      %2353 = vrot.lane.b32.xlu0 %v2294, 4
      %v2354 = vpop.permute.xlu0 %2353
      %2355 = vrot.lane.b32.xlu0 %v2296, 4
      %v2356 = vpop.permute.xlu0 %2355
      %v2387 = vrot.slane %v2160, 2
      %v2388 = vrot.slane %v2067, 2
      %v2389 = vsel %vm619, %v2387, %v2388
      %v2390 = vrot.slane %v2176, 2
      %v2391 = vsel %vm619, %v2388, %v2390
      %v2392 = vrot.slane %v2161, 2
      %v2393 = vrot.slane %v2070, 2
      %v2394 = vsel %vm619, %v2392, %v2393
      %v2395 = vrot.slane %v2177, 2
      %v2396 = vsel %vm619, %v2393, %v2395
      %v2397 = vrot.slane %v2162, 2
      %v2398 = vrot.slane %v2073, 2
      %v2399 = vsel %vm619, %v2397, %v2398
      %v2400 = vrot.slane %v2178, 2
      %v2401 = vsel %vm619, %v2398, %v2400
      %v2402 = vrot.slane %v2163, 2
      %v2403 = vrot.slane %v2076, 2
      %v2404 = vsel %vm619, %v2402, %v2403
      %v2405 = vrot.slane %v2179, 2
      %v2406 = vsel %vm619, %v2403, %v2405
      %v2407 = vrot.slane %v2164, 2
      %v2408 = vrot.slane %v2079, 2
      %v2409 = vsel %vm619, %v2407, %v2408
      %v2410 = vrot.slane %v2180, 2
      %v2411 = vsel %vm619, %v2408, %v2410
      %v2412 = vrot.slane %v2165, 2
      %v2413 = vrot.slane %v2082, 2
      %v2414 = vsel %vm619, %v2412, %v2413
      %v2415 = vrot.slane %v2181, 2
      %v2416 = vsel %vm619, %v2413, %v2415
      %v2417 = vrot.slane %v2166, 2
      %v2418 = vrot.slane %v2085, 2
      %v2419 = vsel %vm619, %v2417, %v2418
      %v2420 = vrot.slane %v2182, 2
      %v2421 = vsel %vm619, %v2418, %v2420
      %v2422 = vrot.slane %v2167, 2
      %v2423 = vrot.slane %v2088, 2
      %v2424 = vsel %vm619, %v2422, %v2423
      %v2425 = vrot.slane %v2183, 2
      %v2426 = vsel %vm619, %v2423, %v2425
      %v2427 = vrot.slane %v2168, 2
      %v2428 = vrot.slane %v2091, 2
      %v2429 = vsel %vm619, %v2427, %v2428
      %v2430 = vrot.slane %v2184, 2
      %v2431 = vsel %vm619, %v2428, %v2430
      %v2432 = vrot.slane %v2169, 2
      %v2433 = vrot.slane %v2094, 2
      %v2434 = vsel %vm619, %v2432, %v2433
      %v2435 = vrot.slane %v2185, 2
      %v2436 = vsel %vm619, %v2433, %v2435
      %v2437 = vrot.slane %v2170, 2
      %v2438 = vrot.slane %v2097, 2
      %v2439 = vsel %vm619, %v2437, %v2438
      %v2440 = vrot.slane %v2186, 2
      %v2441 = vsel %vm619, %v2438, %v2440
      %v2442 = vrot.slane %v2171, 2
      %v2443 = vrot.slane %v2100, 2
      %v2444 = vsel %vm619, %v2442, %v2443
      %v2445 = vrot.slane %v2187, 2
      %v2446 = vsel %vm619, %v2443, %v2445
      %v2447 = vrot.slane %v2172, 2
      %v2448 = vrot.slane %v2103, 2
      %v2449 = vsel %vm619, %v2447, %v2448
      %v2450 = vrot.slane %v2188, 2
      %v2451 = vsel %vm619, %v2448, %v2450
      %v2452 = vrot.slane %v2173, 2
      %v2453 = vrot.slane %v2106, 2
      %v2454 = vsel %vm619, %v2452, %v2453
      %v2455 = vrot.slane %v2189, 2
      %v2456 = vsel %vm619, %v2453, %v2455
      %v2457 = vrot.slane %v2174, 2
      %v2458 = vrot.slane %v2109, 2
      %v2459 = vsel %vm619, %v2457, %v2458
      %v2460 = vrot.slane %v2190, 2
      %v2461 = vsel %vm619, %v2458, %v2460
      %2462 = vrot.lane.b32.xlu0 %v2389, 8
      %v2463 = vpop.permute.xlu0 %2462
      %2464 = vrot.lane.b32.xlu0 %v2391, 8
      %v2465 = vpop.permute.xlu0 %2464
      %2466 = vrot.lane.b32.xlu0 %v2394, 8
      %v2467 = vpop.permute.xlu0 %2466
      %2468 = vrot.lane.b32.xlu0 %v2396, 8
      %v2469 = vpop.permute.xlu0 %2468
      %2470 = vrot.lane.b32.xlu0 %v2399, 8
      %v2471 = vpop.permute.xlu0 %2470
      %2472 = vrot.lane.b32.xlu0 %v2401, 8
      %v2473 = vpop.permute.xlu0 %2472
      %2474 = vrot.lane.b32.xlu0 %v2404, 8
      %v2475 = vpop.permute.xlu0 %2474
      %2476 = vrot.lane.b32.xlu0 %v2406, 8
      %v2477 = vpop.permute.xlu0 %2476
      %2478 = vrot.lane.b32.xlu0 %v2409, 8
      %v2479 = vpop.permute.xlu0 %2478
      %2480 = vrot.lane.b32.xlu0 %v2411, 8
      %v2481 = vpop.permute.xlu0 %2480
      %2482 = vrot.lane.b32.xlu0 %v2414, 8
      %v2483 = vpop.permute.xlu0 %2482
      %2484 = vrot.lane.b32.xlu0 %v2416, 8
      %v2485 = vpop.permute.xlu0 %2484
      %2486 = vrot.lane.b32.xlu0 %v2419, 8
      %v2487 = vpop.permute.xlu0 %2486
      %2488 = vrot.lane.b32.xlu0 %v2421, 8
      %v2489 = vpop.permute.xlu0 %2488
      %2490 = vrot.lane.b32.xlu0 %v2424, 8
      %v2491 = vpop.permute.xlu0 %2490
      %2492 = vrot.lane.b32.xlu0 %v2426, 8
      %v2493 = vpop.permute.xlu0 %2492
      %2494 = vrot.lane.b32.xlu0 %v2429, 8
      %v2495 = vpop.permute.xlu0 %2494
      %2496 = vrot.lane.b32.xlu0 %v2431, 8
      %v2497 = vpop.permute.xlu0 %2496
      %2498 = vrot.lane.b32.xlu0 %v2434, 8
      %v2499 = vpop.permute.xlu0 %2498
      %2500 = vrot.lane.b32.xlu0 %v2436, 8
      %v2501 = vpop.permute.xlu0 %2500
      %2502 = vrot.lane.b32.xlu0 %v2439, 8
      %v2503 = vpop.permute.xlu0 %2502
      %2504 = vrot.lane.b32.xlu0 %v2441, 8
      %v2505 = vpop.permute.xlu0 %2504
      %2506 = vrot.lane.b32.xlu0 %v2444, 8
      %v2507 = vpop.permute.xlu0 %2506
      %2508 = vrot.lane.b32.xlu0 %v2446, 8
      %v2509 = vpop.permute.xlu0 %2508
      %2510 = vrot.lane.b32.xlu0 %v2449, 8
      %v2511 = vpop.permute.xlu0 %2510
      %2512 = vrot.lane.b32.xlu0 %v2451, 8
      %v2513 = vpop.permute.xlu0 %2512
      %2514 = vrot.lane.b32.xlu0 %v2454, 8
      %v2515 = vpop.permute.xlu0 %2514
      %2516 = vrot.lane.b32.xlu0 %v2456, 8
      %v2517 = vpop.permute.xlu0 %2516
      %2518 = vrot.lane.b32.xlu0 %v2459, 8
      %v2519 = vpop.permute.xlu0 %2518
      %2520 = vrot.lane.b32.xlu0 %v2461, 8
      %v2521 = vpop.permute.xlu0 %2520
      %2553 = vrot.lane.b32.xlu0 %v2160, 12
      %v2554 = vpop.permute.xlu0 %2553
      %2555 = vrot.lane.b32.xlu0 %v2067, 12
      %v2556 = vpop.permute.xlu0 %2555
      %2557 = vrot.lane.b32.xlu0 %v2161, 12
      %v2558 = vpop.permute.xlu0 %2557
      %2559 = vrot.lane.b32.xlu0 %v2070, 12
      %v2560 = vpop.permute.xlu0 %2559
      %2561 = vrot.lane.b32.xlu0 %v2162, 12
      %v2562 = vpop.permute.xlu0 %2561
      %2563 = vrot.lane.b32.xlu0 %v2073, 12
      %v2564 = vpop.permute.xlu0 %2563
      %2565 = vrot.lane.b32.xlu0 %v2163, 12
      %v2566 = vpop.permute.xlu0 %2565
      %2567 = vrot.lane.b32.xlu0 %v2076, 12
      %v2568 = vpop.permute.xlu0 %2567
      %2569 = vrot.lane.b32.xlu0 %v2164, 12
      %v2570 = vpop.permute.xlu0 %2569
      %2571 = vrot.lane.b32.xlu0 %v2079, 12
      %v2572 = vpop.permute.xlu0 %2571
      %2573 = vrot.lane.b32.xlu0 %v2165, 12
      %v2574 = vpop.permute.xlu0 %2573
      %2575 = vrot.lane.b32.xlu0 %v2082, 12
      %v2576 = vpop.permute.xlu0 %2575
      %2577 = vrot.lane.b32.xlu0 %v2166, 12
      %v2578 = vpop.permute.xlu0 %2577
      %2579 = vrot.lane.b32.xlu0 %v2085, 12
      %v2580 = vpop.permute.xlu0 %2579
      %2581 = vrot.lane.b32.xlu0 %v2167, 12
      %v2582 = vpop.permute.xlu0 %2581
      %2583 = vrot.lane.b32.xlu0 %v2088, 12
      %v2584 = vpop.permute.xlu0 %2583
      %2585 = vrot.lane.b32.xlu0 %v2168, 12
      %v2586 = vpop.permute.xlu0 %2585
      %2587 = vrot.lane.b32.xlu0 %v2091, 12
      %v2588 = vpop.permute.xlu0 %2587
      %2589 = vrot.lane.b32.xlu0 %v2169, 12
      %v2590 = vpop.permute.xlu0 %2589
      %2591 = vrot.lane.b32.xlu0 %v2094, 12
      %v2592 = vpop.permute.xlu0 %2591
      %2593 = vrot.lane.b32.xlu0 %v2170, 12
      %v2594 = vpop.permute.xlu0 %2593
      %2595 = vrot.lane.b32.xlu0 %v2097, 12
      %v2596 = vpop.permute.xlu0 %2595
      %2597 = vrot.lane.b32.xlu0 %v2171, 12
      %v2598 = vpop.permute.xlu0 %2597
      %2599 = vrot.lane.b32.xlu0 %v2100, 12
      %v2600 = vpop.permute.xlu0 %2599
      %2601 = vrot.lane.b32.xlu0 %v2172, 12
      %v2602 = vpop.permute.xlu0 %2601
      %2603 = vrot.lane.b32.xlu0 %v2103, 12
      %v2604 = vpop.permute.xlu0 %2603
      %2605 = vrot.lane.b32.xlu0 %v2173, 12
      %v2606 = vpop.permute.xlu0 %2605
      %2607 = vrot.lane.b32.xlu0 %v2106, 12
      %v2608 = vpop.permute.xlu0 %2607
      %2609 = vrot.lane.b32.xlu0 %v2174, 12
      %v2610 = vpop.permute.xlu0 %2609
      %2611 = vrot.lane.b32.xlu0 %v2109, 12
      %v2612 = vpop.permute.xlu0 %2611
      %2613 = vrot.lane.b32.xlu0 %v2175, 12
      %v2614 = vpop.permute.xlu0 %2613
      %2615 = vrot.lane.b32.xlu0 %v2112, 12
      %v2616 = vpop.permute.xlu0 %2615
      %v2650 = vrot.slane %v2175, 1
      %v2651 = vrot.slane %v2112, 1
      %v2652 = vsel %vm448, %v2650, %v2651
      %v2653 = vrot.slane %v2191, 1
      %v2654 = vsel %vm448, %v2651, %v2653
      %2655 = vrot.lane.b32.xlu0 %v2224, 16
      %v2656 = vpop.permute.xlu0 %2655
      %2657 = vrot.lane.b32.xlu0 %v2226, 16
      %v2658 = vpop.permute.xlu0 %2657
      %2659 = vrot.lane.b32.xlu0 %v2229, 16
      %v2660 = vpop.permute.xlu0 %2659
      %2661 = vrot.lane.b32.xlu0 %v2231, 16
      %v2662 = vpop.permute.xlu0 %2661
      %2663 = vrot.lane.b32.xlu0 %v2234, 16
      %v2664 = vpop.permute.xlu0 %2663
      %2665 = vrot.lane.b32.xlu0 %v2236, 16
      %v2666 = vpop.permute.xlu0 %2665
      %2667 = vrot.lane.b32.xlu0 %v2239, 16
      %v2668 = vpop.permute.xlu0 %2667
      %2669 = vrot.lane.b32.xlu0 %v2241, 16
      %v2670 = vpop.permute.xlu0 %2669
      %2671 = vrot.lane.b32.xlu0 %v2244, 16
      %v2672 = vpop.permute.xlu0 %2671
      %2673 = vrot.lane.b32.xlu0 %v2246, 16
      %v2674 = vpop.permute.xlu0 %2673
      %2675 = vrot.lane.b32.xlu0 %v2249, 16
      %v2676 = vpop.permute.xlu0 %2675
      %2677 = vrot.lane.b32.xlu0 %v2251, 16
      %v2678 = vpop.permute.xlu0 %2677
      %2679 = vrot.lane.b32.xlu0 %v2254, 16
      %v2680 = vpop.permute.xlu0 %2679
      %2681 = vrot.lane.b32.xlu0 %v2256, 16
      %v2682 = vpop.permute.xlu0 %2681
      %2683 = vrot.lane.b32.xlu0 %v2259, 16
      %v2684 = vpop.permute.xlu0 %2683
      %2685 = vrot.lane.b32.xlu0 %v2261, 16
      %v2686 = vpop.permute.xlu0 %2685
      %2687 = vrot.lane.b32.xlu0 %v2264, 16
      %v2688 = vpop.permute.xlu0 %2687
      %2689 = vrot.lane.b32.xlu0 %v2266, 16
      %v2690 = vpop.permute.xlu0 %2689
      %2691 = vrot.lane.b32.xlu0 %v2269, 16
      %v2692 = vpop.permute.xlu0 %2691
      %2693 = vrot.lane.b32.xlu0 %v2271, 16
      %v2694 = vpop.permute.xlu0 %2693
      %2695 = vrot.lane.b32.xlu0 %v2274, 16
      %v2696 = vpop.permute.xlu0 %2695
      %2697 = vrot.lane.b32.xlu0 %v2276, 16
      %v2698 = vpop.permute.xlu0 %2697
      %2699 = vrot.lane.b32.xlu0 %v2279, 16
      %v2700 = vpop.permute.xlu0 %2699
      %2701 = vrot.lane.b32.xlu0 %v2281, 16
      %v2702 = vpop.permute.xlu0 %2701
      %2703 = vrot.lane.b32.xlu0 %v2284, 16
      %v2704 = vpop.permute.xlu0 %2703
      %2705 = vrot.lane.b32.xlu0 %v2286, 16
      %v2706 = vpop.permute.xlu0 %2705
      %2707 = vrot.lane.b32.xlu0 %v2289, 16
      %v2708 = vpop.permute.xlu0 %2707
      %2709 = vrot.lane.b32.xlu0 %v2291, 16
      %v2710 = vpop.permute.xlu0 %2709
      %2711 = vrot.lane.b32.xlu0 %v2294, 16
      %v2712 = vpop.permute.xlu0 %2711
      %2713 = vrot.lane.b32.xlu0 %v2296, 16
      %v2714 = vpop.permute.xlu0 %2713
      %2715 = vrot.lane.b32.xlu0 %v2652, 16
      %v2716 = vpop.permute.xlu0 %2715
      %2717 = vrot.lane.b32.xlu0 %v2654, 16
      %v2718 = vpop.permute.xlu0 %2717
      %v2751 = vrot.slane %v2175, 2
      %v2752 = vrot.slane %v2112, 2
      %v2753 = vsel %vm619, %v2751, %v2752
      %v2754 = vrot.slane %v2191, 2
      %v2755 = vsel %vm619, %v2752, %v2754
      %2756 = vrot.lane.b32.xlu0 %v2389, 20
      %v2757 = vpop.permute.xlu0 %2756
      %2758 = vrot.lane.b32.xlu0 %v2391, 20
      %v2759 = vpop.permute.xlu0 %2758
      %2760 = vrot.lane.b32.xlu0 %v2394, 20
      %v2761 = vpop.permute.xlu0 %2760
      %2762 = vrot.lane.b32.xlu0 %v2396, 20
      %v2763 = vpop.permute.xlu0 %2762
      %2764 = vrot.lane.b32.xlu0 %v2399, 20
      %v2765 = vpop.permute.xlu0 %2764
      %2766 = vrot.lane.b32.xlu0 %v2401, 20
      %v2767 = vpop.permute.xlu0 %2766
      %2768 = vrot.lane.b32.xlu0 %v2404, 20
      %v2769 = vpop.permute.xlu0 %2768
      %2770 = vrot.lane.b32.xlu0 %v2406, 20
      %v2771 = vpop.permute.xlu0 %2770
      %2772 = vrot.lane.b32.xlu0 %v2409, 20
      %v2773 = vpop.permute.xlu0 %2772
      %2774 = vrot.lane.b32.xlu0 %v2411, 20
      %v2775 = vpop.permute.xlu0 %2774
      %2776 = vrot.lane.b32.xlu0 %v2414, 20
      %v2777 = vpop.permute.xlu0 %2776
      %2778 = vrot.lane.b32.xlu0 %v2416, 20
      %v2779 = vpop.permute.xlu0 %2778
      %2780 = vrot.lane.b32.xlu0 %v2419, 20
      %v2781 = vpop.permute.xlu0 %2780
      %2782 = vrot.lane.b32.xlu0 %v2421, 20
      %v2783 = vpop.permute.xlu0 %2782
      %2784 = vrot.lane.b32.xlu0 %v2424, 20
      %v2785 = vpop.permute.xlu0 %2784
      %2786 = vrot.lane.b32.xlu0 %v2426, 20
      %v2787 = vpop.permute.xlu0 %2786
      %2788 = vrot.lane.b32.xlu0 %v2429, 20
      %v2789 = vpop.permute.xlu0 %2788
      %2790 = vrot.lane.b32.xlu0 %v2431, 20
      %v2791 = vpop.permute.xlu0 %2790
      %2792 = vrot.lane.b32.xlu0 %v2434, 20
      %v2793 = vpop.permute.xlu0 %2792
      %2794 = vrot.lane.b32.xlu0 %v2436, 20
      %v2795 = vpop.permute.xlu0 %2794
      %2796 = vrot.lane.b32.xlu0 %v2439, 20
      %v2797 = vpop.permute.xlu0 %2796
      %2798 = vrot.lane.b32.xlu0 %v2441, 20
      %v2799 = vpop.permute.xlu0 %2798
      %2800 = vrot.lane.b32.xlu0 %v2444, 20
      %v2801 = vpop.permute.xlu0 %2800
      %2802 = vrot.lane.b32.xlu0 %v2446, 20
      %v2803 = vpop.permute.xlu0 %2802
      %2804 = vrot.lane.b32.xlu0 %v2449, 20
      %v2805 = vpop.permute.xlu0 %2804
      %2806 = vrot.lane.b32.xlu0 %v2451, 20
      %v2807 = vpop.permute.xlu0 %2806
      %2808 = vrot.lane.b32.xlu0 %v2454, 20
      %v2809 = vpop.permute.xlu0 %2808
      %2810 = vrot.lane.b32.xlu0 %v2456, 20
      %v2811 = vpop.permute.xlu0 %2810
      %2812 = vrot.lane.b32.xlu0 %v2459, 20
      %v2813 = vpop.permute.xlu0 %2812
      %2814 = vrot.lane.b32.xlu0 %v2461, 20
      %v2815 = vpop.permute.xlu0 %2814
      %2816 = vrot.lane.b32.xlu0 %v2753, 20
      %v2817 = vpop.permute.xlu0 %2816
      %2818 = vrot.lane.b32.xlu0 %v2755, 20
      %v2819 = vpop.permute.xlu0 %2818
      %2852 = vrot.lane.b32.xlu0 %v2161, 24
      %v2853 = vpop.permute.xlu0 %2852
      %2854 = vrot.lane.b32.xlu0 %v2070, 24
      %v2855 = vpop.permute.xlu0 %2854
      %2856 = vrot.lane.b32.xlu0 %v2162, 24
      %v2857 = vpop.permute.xlu0 %2856
      %2858 = vrot.lane.b32.xlu0 %v2073, 24
      %v2859 = vpop.permute.xlu0 %2858
      %2860 = vrot.lane.b32.xlu0 %v2163, 24
      %v2861 = vpop.permute.xlu0 %2860
      %2862 = vrot.lane.b32.xlu0 %v2076, 24
      %v2863 = vpop.permute.xlu0 %2862
      %2864 = vrot.lane.b32.xlu0 %v2164, 24
      %v2865 = vpop.permute.xlu0 %2864
      %2866 = vrot.lane.b32.xlu0 %v2079, 24
      %v2867 = vpop.permute.xlu0 %2866
      %2868 = vrot.lane.b32.xlu0 %v2165, 24
      %v2869 = vpop.permute.xlu0 %2868
      %2870 = vrot.lane.b32.xlu0 %v2082, 24
      %v2871 = vpop.permute.xlu0 %2870
      %2872 = vrot.lane.b32.xlu0 %v2166, 24
      %v2873 = vpop.permute.xlu0 %2872
      %2874 = vrot.lane.b32.xlu0 %v2085, 24
      %v2875 = vpop.permute.xlu0 %2874
      %2876 = vrot.lane.b32.xlu0 %v2167, 24
      %v2877 = vpop.permute.xlu0 %2876
      %2878 = vrot.lane.b32.xlu0 %v2088, 24
      %v2879 = vpop.permute.xlu0 %2878
      %2880 = vrot.lane.b32.xlu0 %v2168, 24
      %v2881 = vpop.permute.xlu0 %2880
      %2882 = vrot.lane.b32.xlu0 %v2091, 24
      %v2883 = vpop.permute.xlu0 %2882
      %2884 = vrot.lane.b32.xlu0 %v2169, 24
      %v2885 = vpop.permute.xlu0 %2884
      %2886 = vrot.lane.b32.xlu0 %v2094, 24
      %v2887 = vpop.permute.xlu0 %2886
      %2888 = vrot.lane.b32.xlu0 %v2170, 24
      %v2889 = vpop.permute.xlu0 %2888
      %2890 = vrot.lane.b32.xlu0 %v2097, 24
      %v2891 = vpop.permute.xlu0 %2890
      %2892 = vrot.lane.b32.xlu0 %v2171, 24
      %v2893 = vpop.permute.xlu0 %2892
      %2894 = vrot.lane.b32.xlu0 %v2100, 24
      %v2895 = vpop.permute.xlu0 %2894
      %2896 = vrot.lane.b32.xlu0 %v2172, 24
      %v2897 = vpop.permute.xlu0 %2896
      %2898 = vrot.lane.b32.xlu0 %v2103, 24
      %v2899 = vpop.permute.xlu0 %2898
      %2900 = vrot.lane.b32.xlu0 %v2173, 24
      %v2901 = vpop.permute.xlu0 %2900
      %2902 = vrot.lane.b32.xlu0 %v2106, 24
      %v2903 = vpop.permute.xlu0 %2902
      %2904 = vrot.lane.b32.xlu0 %v2174, 24
      %v2905 = vpop.permute.xlu0 %2904
      %2906 = vrot.lane.b32.xlu0 %v2109, 24
      %v2907 = vpop.permute.xlu0 %2906
      %2908 = vrot.lane.b32.xlu0 %v2175, 24
      %v2909 = vpop.permute.xlu0 %2908
      %2910 = vrot.lane.b32.xlu0 %v2112, 24
      %v2911 = vpop.permute.xlu0 %2910
      %2942 = vrot.lane.b32.xlu0 %v2229, 28
      %v2943 = vpop.permute.xlu0 %2942
      %2944 = vrot.lane.b32.xlu0 %v2231, 28
      %v2945 = vpop.permute.xlu0 %2944
      %2946 = vrot.lane.b32.xlu0 %v2234, 28
      %v2947 = vpop.permute.xlu0 %2946
      %2948 = vrot.lane.b32.xlu0 %v2236, 28
      %v2949 = vpop.permute.xlu0 %2948
      %2950 = vrot.lane.b32.xlu0 %v2239, 28
      %v2951 = vpop.permute.xlu0 %2950
      %2952 = vrot.lane.b32.xlu0 %v2241, 28
      %v2953 = vpop.permute.xlu0 %2952
      %2954 = vrot.lane.b32.xlu0 %v2244, 28
      %v2955 = vpop.permute.xlu0 %2954
      %2956 = vrot.lane.b32.xlu0 %v2246, 28
      %v2957 = vpop.permute.xlu0 %2956
      %2958 = vrot.lane.b32.xlu0 %v2249, 28
      %v2959 = vpop.permute.xlu0 %2958
      %2960 = vrot.lane.b32.xlu0 %v2251, 28
      %v2961 = vpop.permute.xlu0 %2960
      %2962 = vrot.lane.b32.xlu0 %v2254, 28
      %v2963 = vpop.permute.xlu0 %2962
      %2964 = vrot.lane.b32.xlu0 %v2256, 28
      %v2965 = vpop.permute.xlu0 %2964
      %2966 = vrot.lane.b32.xlu0 %v2259, 28
      %v2967 = vpop.permute.xlu0 %2966
      %2968 = vrot.lane.b32.xlu0 %v2261, 28
      %v2969 = vpop.permute.xlu0 %2968
      %2970 = vrot.lane.b32.xlu0 %v2264, 28
      %v2971 = vpop.permute.xlu0 %2970
      %2972 = vrot.lane.b32.xlu0 %v2266, 28
      %v2973 = vpop.permute.xlu0 %2972
      %2974 = vrot.lane.b32.xlu0 %v2269, 28
      %v2975 = vpop.permute.xlu0 %2974
      %2976 = vrot.lane.b32.xlu0 %v2271, 28
      %v2977 = vpop.permute.xlu0 %2976
      %2978 = vrot.lane.b32.xlu0 %v2274, 28
      %v2979 = vpop.permute.xlu0 %2978
      %2980 = vrot.lane.b32.xlu0 %v2276, 28
      %v2981 = vpop.permute.xlu0 %2980
      %2982 = vrot.lane.b32.xlu0 %v2279, 28
      %v2983 = vpop.permute.xlu0 %2982
      %2984 = vrot.lane.b32.xlu0 %v2281, 28
      %v2985 = vpop.permute.xlu0 %2984
      %2986 = vrot.lane.b32.xlu0 %v2284, 28
      %v2987 = vpop.permute.xlu0 %2986
      %2988 = vrot.lane.b32.xlu0 %v2286, 28
      %v2989 = vpop.permute.xlu0 %2988
      %2990 = vrot.lane.b32.xlu0 %v2289, 28
      %v2991 = vpop.permute.xlu0 %2990
      %2992 = vrot.lane.b32.xlu0 %v2291, 28
      %v2993 = vpop.permute.xlu0 %2992
      %2994 = vrot.lane.b32.xlu0 %v2294, 28
      %v2995 = vpop.permute.xlu0 %2994
      %2996 = vrot.lane.b32.xlu0 %v2296, 28
      %v2997 = vpop.permute.xlu0 %2996
      %2998 = vrot.lane.b32.xlu0 %v2652, 28
      %v2999 = vpop.permute.xlu0 %2998
      %3000 = vrot.lane.b32.xlu0 %v2654, 28
      %v3001 = vpop.permute.xlu0 %3000
      %3032 = vrot.lane.b32.xlu0 %v2394, 32
      %v3033 = vpop.permute.xlu0 %3032
      %3034 = vrot.lane.b32.xlu0 %v2396, 32
      %v3035 = vpop.permute.xlu0 %3034
      %3036 = vrot.lane.b32.xlu0 %v2399, 32
      %v3037 = vpop.permute.xlu0 %3036
      %3038 = vrot.lane.b32.xlu0 %v2401, 32
      %v3039 = vpop.permute.xlu0 %3038
      %3040 = vrot.lane.b32.xlu0 %v2404, 32
      %v3041 = vpop.permute.xlu0 %3040
      %3042 = vrot.lane.b32.xlu0 %v2406, 32
      %v3043 = vpop.permute.xlu0 %3042
      %3044 = vrot.lane.b32.xlu0 %v2409, 32
      %v3045 = vpop.permute.xlu0 %3044
      %3046 = vrot.lane.b32.xlu0 %v2411, 32
      %v3047 = vpop.permute.xlu0 %3046
      %3048 = vrot.lane.b32.xlu0 %v2414, 32
      %v3049 = vpop.permute.xlu0 %3048
      %3050 = vrot.lane.b32.xlu0 %v2416, 32
      %v3051 = vpop.permute.xlu0 %3050
      %3052 = vrot.lane.b32.xlu0 %v2419, 32
      %v3053 = vpop.permute.xlu0 %3052
      %3054 = vrot.lane.b32.xlu0 %v2421, 32
      %v3055 = vpop.permute.xlu0 %3054
      %3056 = vrot.lane.b32.xlu0 %v2424, 32
      %v3057 = vpop.permute.xlu0 %3056
      %3058 = vrot.lane.b32.xlu0 %v2426, 32
      %v3059 = vpop.permute.xlu0 %3058
      %3060 = vrot.lane.b32.xlu0 %v2429, 32
      %v3061 = vpop.permute.xlu0 %3060
      %3062 = vrot.lane.b32.xlu0 %v2431, 32
      %v3063 = vpop.permute.xlu0 %3062
      %3064 = vrot.lane.b32.xlu0 %v2434, 32
      %v3065 = vpop.permute.xlu0 %3064
      %3066 = vrot.lane.b32.xlu0 %v2436, 32
      %v3067 = vpop.permute.xlu0 %3066
      %3068 = vrot.lane.b32.xlu0 %v2439, 32
      %v3069 = vpop.permute.xlu0 %3068
      %3070 = vrot.lane.b32.xlu0 %v2441, 32
      %v3071 = vpop.permute.xlu0 %3070
      %3072 = vrot.lane.b32.xlu0 %v2444, 32
      %v3073 = vpop.permute.xlu0 %3072
      %3074 = vrot.lane.b32.xlu0 %v2446, 32
      %v3075 = vpop.permute.xlu0 %3074
      %3076 = vrot.lane.b32.xlu0 %v2449, 32
      %v3077 = vpop.permute.xlu0 %3076
      %3078 = vrot.lane.b32.xlu0 %v2451, 32
      %v3079 = vpop.permute.xlu0 %3078
      %3080 = vrot.lane.b32.xlu0 %v2454, 32
      %v3081 = vpop.permute.xlu0 %3080
      %3082 = vrot.lane.b32.xlu0 %v2456, 32
      %v3083 = vpop.permute.xlu0 %3082
      %3084 = vrot.lane.b32.xlu0 %v2459, 32
      %v3085 = vpop.permute.xlu0 %3084
      %3086 = vrot.lane.b32.xlu0 %v2461, 32
      %v3087 = vpop.permute.xlu0 %3086
      %3088 = vrot.lane.b32.xlu0 %v2753, 32
      %v3089 = vpop.permute.xlu0 %3088
      %3090 = vrot.lane.b32.xlu0 %v2755, 32
      %v3091 = vpop.permute.xlu0 %3090
      %v3122 = vsel %vm1369, %v2160, %v2298
      %v3123 = vsel %vm1369, %v2067, %v2300
      %v3124 = vsel %vm1369, %v2161, %v2302
      %v3125 = vsel %vm1369, %v2070, %v2304
      %v3126 = vsel %vm1369, %v2162, %v2306
      %v3127 = vsel %vm1369, %v2073, %v2308
      %v3128 = vsel %vm1369, %v2163, %v2310
      %v3129 = vsel %vm1369, %v2076, %v2312
      %v3130 = vsel %vm1369, %v2164, %v2314
      %v3131 = vsel %vm1369, %v2079, %v2316
      %v3132 = vsel %vm1369, %v2165, %v2318
      %v3133 = vsel %vm1369, %v2082, %v2320
      %v3134 = vsel %vm1369, %v2166, %v2322
      %v3135 = vsel %vm1369, %v2085, %v2324
      %v3136 = vsel %vm1369, %v2167, %v2326
      %v3137 = vsel %vm1369, %v2088, %v2328
      %v3138 = vsel %vm1369, %v2168, %v2330
      %v3139 = vsel %vm1369, %v2091, %v2332
      %v3140 = vsel %vm1369, %v2169, %v2334
      %v3141 = vsel %vm1369, %v2094, %v2336
      %v3142 = vsel %vm1369, %v2170, %v2338
      %v3143 = vsel %vm1369, %v2097, %v2340
      %v3144 = vsel %vm1369, %v2171, %v2342
      %v3145 = vsel %vm1369, %v2100, %v2344
      %v3146 = vsel %vm1369, %v2172, %v2346
      %v3147 = vsel %vm1369, %v2103, %v2348
      %v3148 = vsel %vm1369, %v2173, %v2350
      %v3149 = vsel %vm1369, %v2106, %v2352
      %v3150 = vsel %vm1369, %v2174, %v2354
      %v3151 = vsel %vm1369, %v2109, %v2356
      %v3152 = vsel %vm1401, %v3122, %v2463
      %v3153 = vsel %vm1401, %v3123, %v2465
      %v3154 = vsel %vm1401, %v3124, %v2467
      %v3155 = vsel %vm1401, %v3125, %v2469
      %v3156 = vsel %vm1401, %v3126, %v2471
      %v3157 = vsel %vm1401, %v3127, %v2473
      %v3158 = vsel %vm1401, %v3128, %v2475
      %v3159 = vsel %vm1401, %v3129, %v2477
      %v3160 = vsel %vm1401, %v3130, %v2479
      %v3161 = vsel %vm1401, %v3131, %v2481
      %v3162 = vsel %vm1401, %v3132, %v2483
      %v3163 = vsel %vm1401, %v3133, %v2485
      %v3164 = vsel %vm1401, %v3134, %v2487
      %v3165 = vsel %vm1401, %v3135, %v2489
      %v3166 = vsel %vm1401, %v3136, %v2491
      %v3167 = vsel %vm1401, %v3137, %v2493
      %v3168 = vsel %vm1401, %v3138, %v2495
      %v3169 = vsel %vm1401, %v3139, %v2497
      %v3170 = vsel %vm1401, %v3140, %v2499
      %v3171 = vsel %vm1401, %v3141, %v2501
      %v3172 = vsel %vm1401, %v3142, %v2503
      %v3173 = vsel %vm1401, %v3143, %v2505
      %v3174 = vsel %vm1401, %v3144, %v2507
      %v3175 = vsel %vm1401, %v3145, %v2509
      %v3176 = vsel %vm1401, %v3146, %v2511
      %v3177 = vsel %vm1401, %v3147, %v2513
      %v3178 = vsel %vm1401, %v3148, %v2515
      %v3179 = vsel %vm1401, %v3149, %v2517
      %v3180 = vsel %vm1401, %v3150, %v2519
      %v3181 = vsel %vm1401, %v3151, %v2521
      %v3182 = vsel %vm1433, %v1402, %v2554
      %v3183 = vsel %vm1433, %v1402, %v2556
      %v3184 = vsel %vm1433, %v3152, %v2558
      %v3185 = vsel %vm1433, %v3153, %v2560
      %v3186 = vsel %vm1433, %v3154, %v2562
      %v3187 = vsel %vm1433, %v3155, %v2564
      %v3188 = vsel %vm1433, %v3156, %v2566
      %v3189 = vsel %vm1433, %v3157, %v2568
      %v3190 = vsel %vm1433, %v3158, %v2570
      %v3191 = vsel %vm1433, %v3159, %v2572
      %v3192 = vsel %vm1433, %v3160, %v2574
      %v3193 = vsel %vm1433, %v3161, %v2576
      %v3194 = vsel %vm1433, %v3162, %v2578
      %v3195 = vsel %vm1433, %v3163, %v2580
      %v3196 = vsel %vm1433, %v3164, %v2582
      %v3197 = vsel %vm1433, %v3165, %v2584
      %v3198 = vsel %vm1433, %v3166, %v2586
      %v3199 = vsel %vm1433, %v3167, %v2588
      %v3200 = vsel %vm1433, %v3168, %v2590
      %v3201 = vsel %vm1433, %v3169, %v2592
      %v3202 = vsel %vm1433, %v3170, %v2594
      %v3203 = vsel %vm1433, %v3171, %v2596
      %v3204 = vsel %vm1433, %v3172, %v2598
      %v3205 = vsel %vm1433, %v3173, %v2600
      %v3206 = vsel %vm1433, %v3174, %v2602
      %v3207 = vsel %vm1433, %v3175, %v2604
      %v3208 = vsel %vm1433, %v3176, %v2606
      %v3209 = vsel %vm1433, %v3177, %v2608
      %v3210 = vsel %vm1433, %v3178, %v2610
      %v3211 = vsel %vm1433, %v3179, %v2612
      %v3212 = vsel %vm1433, %v3180, %v2614
      %v3213 = vsel %vm1433, %v3181, %v2616
      %v3214 = vsel %vm1466, %v3182, %v2656
      %v3215 = vsel %vm1466, %v3183, %v2658
      %v3216 = vsel %vm1466, %v3184, %v2660
      %v3217 = vsel %vm1466, %v3185, %v2662
      %v3218 = vsel %vm1466, %v3186, %v2664
      %v3219 = vsel %vm1466, %v3187, %v2666
      %v3220 = vsel %vm1466, %v3188, %v2668
      %v3221 = vsel %vm1466, %v3189, %v2670
      %v3222 = vsel %vm1466, %v3190, %v2672
      %v3223 = vsel %vm1466, %v3191, %v2674
      %v3224 = vsel %vm1466, %v3192, %v2676
      %v3225 = vsel %vm1466, %v3193, %v2678
      %v3226 = vsel %vm1466, %v3194, %v2680
      %v3227 = vsel %vm1466, %v3195, %v2682
      %v3228 = vsel %vm1466, %v3196, %v2684
      %v3229 = vsel %vm1466, %v3197, %v2686
      %v3230 = vsel %vm1466, %v3198, %v2688
      %v3231 = vsel %vm1466, %v3199, %v2690
      %v3232 = vsel %vm1466, %v3200, %v2692
      %v3233 = vsel %vm1466, %v3201, %v2694
      %v3234 = vsel %vm1466, %v3202, %v2696
      %v3235 = vsel %vm1466, %v3203, %v2698
      %v3236 = vsel %vm1466, %v3204, %v2700
      %v3237 = vsel %vm1466, %v3205, %v2702
      %v3238 = vsel %vm1466, %v3206, %v2704
      %v3239 = vsel %vm1466, %v3207, %v2706
      %v3240 = vsel %vm1466, %v3208, %v2708
      %v3241 = vsel %vm1466, %v3209, %v2710
      %v3242 = vsel %vm1466, %v3210, %v2712
      %v3243 = vsel %vm1466, %v3211, %v2714
      %v3244 = vsel %vm1466, %v3212, %v2716
      %v3245 = vsel %vm1466, %v3213, %v2718
      %v3246 = vsel %vm1499, %v3214, %v2757
      %v3247 = vsel %vm1499, %v3215, %v2759
      %v3248 = vsel %vm1499, %v3216, %v2761
      %v3249 = vsel %vm1499, %v3217, %v2763
      %v3250 = vsel %vm1499, %v3218, %v2765
      %v3251 = vsel %vm1499, %v3219, %v2767
      %v3252 = vsel %vm1499, %v3220, %v2769
      %v3253 = vsel %vm1499, %v3221, %v2771
      %v3254 = vsel %vm1499, %v3222, %v2773
      %v3255 = vsel %vm1499, %v3223, %v2775
      %v3256 = vsel %vm1499, %v3224, %v2777
      %v3257 = vsel %vm1499, %v3225, %v2779
      %v3258 = vsel %vm1499, %v3226, %v2781
      %v3259 = vsel %vm1499, %v3227, %v2783
      %v3260 = vsel %vm1499, %v3228, %v2785
      %v3261 = vsel %vm1499, %v3229, %v2787
      %v3262 = vsel %vm1499, %v3230, %v2789
      %v3263 = vsel %vm1499, %v3231, %v2791
      %v3264 = vsel %vm1499, %v3232, %v2793
      %v3265 = vsel %vm1499, %v3233, %v2795
      %v3266 = vsel %vm1499, %v3234, %v2797
      %v3267 = vsel %vm1499, %v3235, %v2799
      %v3268 = vsel %vm1499, %v3236, %v2801
      %v3269 = vsel %vm1499, %v3237, %v2803
      %v3270 = vsel %vm1499, %v3238, %v2805
      %v3271 = vsel %vm1499, %v3239, %v2807
      %v3272 = vsel %vm1499, %v3240, %v2809
      %v3273 = vsel %vm1499, %v3241, %v2811
      %v3274 = vsel %vm1499, %v3242, %v2813
      %v3275 = vsel %vm1499, %v3243, %v2815
      %v3276 = vsel %vm1499, %v3244, %v2817
      %v3277 = vsel %vm1499, %v3245, %v2819
      %v3278 = vsel %vm1532, %v3246, %v2853
      %v3279 = vsel %vm1532, %v3247, %v2855
      %v3280 = vsel %vm1532, %v3248, %v2857
      %v3281 = vsel %vm1532, %v3249, %v2859
      %v3282 = vsel %vm1532, %v3250, %v2861
      %v3283 = vsel %vm1532, %v3251, %v2863
      %v3284 = vsel %vm1532, %v3252, %v2865
      %v3285 = vsel %vm1532, %v3253, %v2867
      %v3286 = vsel %vm1532, %v3254, %v2869
      %v3287 = vsel %vm1532, %v3255, %v2871
      %v3288 = vsel %vm1532, %v3256, %v2873
      %v3289 = vsel %vm1532, %v3257, %v2875
      %v3290 = vsel %vm1532, %v3258, %v2877
      %v3291 = vsel %vm1532, %v3259, %v2879
      %v3292 = vsel %vm1532, %v3260, %v2881
      %v3293 = vsel %vm1532, %v3261, %v2883
      %v3294 = vsel %vm1532, %v3262, %v2885
      %v3295 = vsel %vm1532, %v3263, %v2887
      %v3296 = vsel %vm1532, %v3264, %v2889
      %v3297 = vsel %vm1532, %v3265, %v2891
      %v3298 = vsel %vm1532, %v3266, %v2893
      %v3299 = vsel %vm1532, %v3267, %v2895
      %v3300 = vsel %vm1532, %v3268, %v2897
      %v3301 = vsel %vm1532, %v3269, %v2899
      %v3302 = vsel %vm1532, %v3270, %v2901
      %v3303 = vsel %vm1532, %v3271, %v2903
      %v3304 = vsel %vm1532, %v3272, %v2905
      %v3305 = vsel %vm1532, %v3273, %v2907
      %v3306 = vsel %vm1532, %v3274, %v2909
      %v3307 = vsel %vm1532, %v3275, %v2911
      %v3308 = vsel %vm1532, %v3276, %v1151
      %v3309 = vsel %vm1532, %v3277, %v1151
      %v3310 = vsel %vm1565, %v3278, %v2943
      %v3311 = vsel %vm1565, %v3279, %v2945
      %v3312 = vsel %vm1565, %v3280, %v2947
      %v3313 = vsel %vm1565, %v3281, %v2949
      %v3314 = vsel %vm1565, %v3282, %v2951
      %v3315 = vsel %vm1565, %v3283, %v2953
      %v3316 = vsel %vm1565, %v3284, %v2955
      %v3317 = vsel %vm1565, %v3285, %v2957
      %v3318 = vsel %vm1565, %v3286, %v2959
      %v3319 = vsel %vm1565, %v3287, %v2961
      %v3320 = vsel %vm1565, %v3288, %v2963
      %v3321 = vsel %vm1565, %v3289, %v2965
      %v3322 = vsel %vm1565, %v3290, %v2967
      %v3323 = vsel %vm1565, %v3291, %v2969
      %v3324 = vsel %vm1565, %v3292, %v2971
      %v3325 = vsel %vm1565, %v3293, %v2973
      %v3326 = vsel %vm1565, %v3294, %v2975
      %v3327 = vsel %vm1565, %v3295, %v2977
      %v3328 = vsel %vm1565, %v3296, %v2979
      %v3329 = vsel %vm1565, %v3297, %v2981
      %v3330 = vsel %vm1565, %v3298, %v2983
      %v3331 = vsel %vm1565, %v3299, %v2985
      %v3332 = vsel %vm1565, %v3300, %v2987
      %v3333 = vsel %vm1565, %v3301, %v2989
      %v3334 = vsel %vm1565, %v3302, %v2991
      %v3335 = vsel %vm1565, %v3303, %v2993
      %v3336 = vsel %vm1565, %v3304, %v2995
      %v3337 = vsel %vm1565, %v3305, %v2997
      %v3338 = vsel %vm1565, %v3306, %v2999
      %v3339 = vsel %vm1565, %v3307, %v3001
      %v3340 = vsel %vm1565, %v3308, %v1244
      %v3341 = vsel %vm1565, %v3309, %v1244
      %v3342 = vsel %vm1598, %v3310, %v3033
      %v3343 = vsel %vm1598, %v3311, %v3035
      %v3344 = vsel %vm1598, %v3312, %v3037
      %v3345 = vsel %vm1598, %v3313, %v3039
      %v3346 = vsel %vm1598, %v3314, %v3041
      %v3347 = vsel %vm1598, %v3315, %v3043
      %v3348 = vsel %vm1598, %v3316, %v3045
      %v3349 = vsel %vm1598, %v3317, %v3047
      %v3350 = vsel %vm1598, %v3318, %v3049
      %v3351 = vsel %vm1598, %v3319, %v3051
      %v3352 = vsel %vm1598, %v3320, %v3053
      %v3353 = vsel %vm1598, %v3321, %v3055
      %v3354 = vsel %vm1598, %v3322, %v3057
      %v3355 = vsel %vm1598, %v3323, %v3059
      %v3356 = vsel %vm1598, %v3324, %v3061
      %v3357 = vsel %vm1598, %v3325, %v3063
      %v3358 = vsel %vm1598, %v3326, %v3065
      %v3359 = vsel %vm1598, %v3327, %v3067
      %v3360 = vsel %vm1598, %v3328, %v3069
      %v3361 = vsel %vm1598, %v3329, %v3071
      %v3362 = vsel %vm1598, %v3330, %v3073
      %v3363 = vsel %vm1598, %v3331, %v3075
      %v3364 = vsel %vm1598, %v3332, %v3077
      %v3365 = vsel %vm1598, %v3333, %v3079
      %v3366 = vsel %vm1598, %v3334, %v3081
      %v3367 = vsel %vm1598, %v3335, %v3083
      %v3368 = vsel %vm1598, %v3336, %v3085
      %v3369 = vsel %vm1598, %v3337, %v3087
      %v3370 = vsel %vm1598, %v3338, %v3089
      %v3371 = vsel %vm1598, %v3339, %v3091
      %v3372 = vsel %vm1598, %v3340, %v1337
      %v3373 = vsel %vm1598, %v3341, %v1337
      %v3374 = vld [vmem:[%s3] sm:$0xff]
      %v3375 = vld [vmem:[%s3 + $0x8] sm:$0xff]
      %v3376 = vld [vmem:[%s3 + $0x10] sm:$0xff]
      %v3377 = vld [vmem:[%s3 + $0x18] sm:$0xff]
      %v3378 = vld [vmem:[%s3 + $0x20] sm:$0xf]
      %v3380 = vsel %vm1636, %v3342, 0
      %v3383 = vsel %vm1636, %v3343, 0
      %v3386 = vsel %vm1636, %v3344, 0
      %v3389 = vsel %vm1636, %v3345, 0
      %v3392 = vsel %vm1636, %v3346, 0
      %v3395 = vsel %vm1636, %v3347, 0
      %v3398 = vsel %vm1636, %v3348, 0
      %v3401 = vsel %vm1636, %v3349, 0
      %v3404 = vsel %vm1636, %v3350, 0
      %v3407 = vsel %vm1636, %v3351, 0
      %v3410 = vsel %vm1636, %v3352, 0
      %v3413 = vsel %vm1636, %v3353, 0
      %v3416 = vsel %vm1636, %v3354, 0
      %v3419 = vsel %vm1636, %v3355, 0
      %v3422 = vsel %vm1636, %v3356, 0
      %v3425 = vsel %vm1636, %v3357, 0
      %v3428 = vsel %vm1636, %v3358, 0
      %v3431 = vsel %vm1636, %v3359, 0
      %v3434 = vsel %vm1636, %v3360, 0
      %v3437 = vsel %vm1636, %v3361, 0
      %v3440 = vsel %vm1636, %v3362, 0
      %v3443 = vsel %vm1636, %v3363, 0
      %v3446 = vsel %vm1636, %v3364, 0
      %v3449 = vsel %vm1636, %v3365, 0
      %v3452 = vsel %vm1636, %v3366, 0
      %v3455 = vsel %vm1636, %v3367, 0
      %v3458 = vsel %vm1636, %v3368, 0
      %v3461 = vsel %vm1636, %v3369, 0
      %v3464 = vsel %vm1636, %v3370, 0
      %v3467 = vsel %vm1636, %v3371, 0
      %v3470 = vsel %vm1636, %v3372, 0
      %v3473 = vsel %vm1636, %v3373, 0
      %v3476 = vsel %vm1733, %v3378, 0
      %3478 = vmatprep.subr.mxu0 0.0
      %3479 = vmatpush1.msra.mxu0 %v3374
      %3480 = vmatprep.subr.mxu0 0.0
      %3481 = vmatpush1.msra.mxu0 %v3375
      %3482 = vmatprep.subr.mxu0 0.0
      %3483 = vmatpush1.msra.mxu0 %v3376
      %3484 = vmatprep.subr.mxu0 0.0
      %3485 = vmatpush1.msra.mxu0 %v3377
      %3486 = vmatprep.subr.mxu0 0.0
      %3487 = vmatpush1.msra.mxu0 %v3476
      %3488 = vmatprep.subr.mxu0 0.0
      %3489 = vmatpush1.msra.mxu0 0.0
      %3490 = vmatprep.subr.mxu0 0.0
      %3491 = vmatpush1.msra.mxu0 0.0
      %3492 = vmatprep.subr.mxu0 0.0
      %3493 = vmatpush1.msra.mxu0 0.0
      %3494 = vmatprep.subr.mxu0 0.0
      %3495 = vmatpush1.msra.mxu0 0.0
      %3496 = vmatprep.subr.mxu0 0.0
      %3497 = vmatpush1.msra.mxu0 0.0
      %3498 = vmatprep.subr.mxu0 0.0
      %3499 = vmatpush1.msra.mxu0 0.0
      %3500 = vmatprep.subr.mxu0 0.0
      %3501 = vmatpush1.msra.mxu0 0.0
      %3502 = vmatprep.subr.mxu0 0.0
      %3503 = vmatpush1.msra.mxu0 0.0
      %3504 = vmatprep.subr.mxu0 0.0
      %3505 = vmatpush1.msra.mxu0 0.0
      %3506 = vmatprep.subr.mxu0 0.0
      %3507 = vmatpush1.msra.mxu0 0.0
      %3508 = vmatprep.subr.mxu0 0.0
      %3509 = vmatpush1.msra.mxu0 0.0
      %3510 = vmatprep.subr.mxu0 0.0
      %3511 = vmatpush1.msra.mxu0 0.0
      %3512 = vmatprep.subr.mxu0 0.0
      %3513 = vmatpush1.msra.mxu0 0.0
      %3514 = vmatprep.subr.mxu0 0.0
      %3515 = vmatpush1.msra.mxu0 0.0
      %3516 = vmatprep.subr.mxu0 0.0
      %3517 = vmatpush1.msra.mxu0 0.0
      %3518 = vmatprep.subr.mxu0 0.0
      %3519 = vmatpush1.msra.mxu0 0.0
      %3520 = vmatprep.subr.mxu0 0.0
      %3521 = vmatpush1.msra.mxu0 0.0
      %3522 = vmatprep.subr.mxu0 0.0
      %3523 = vmatpush1.msra.mxu0 0.0
      %3524 = vmatprep.subr.mxu0 0.0
      %3525 = vmatpush1.msra.mxu0 0.0
      %3526 = vmatprep.subr.mxu0 0.0
      %3527 = vmatpush1.msra.mxu0 0.0
      %3528 = vmatprep.subr.mxu0 0.0
      %3529 = vmatpush1.msra.mxu0 0.0
      %3530 = vmatprep.subr.mxu0 0.0
      %3531 = vmatpush1.msra.mxu0 0.0
      %3532 = vmatprep.subr.mxu0 0.0
      %3533 = vmatpush1.msra.mxu0 0.0
      %3534 = vmatprep.subr.mxu0 0.0
      %3535 = vmatpush1.msra.mxu0 0.0
      %3536 = vmatprep.subr.mxu0 0.0
      %3537 = vmatpush1.msra.mxu0 0.0
      %3538 = vmatprep.subr.mxu0 0.0
      %3539 = vmatpush1.msra.mxu0 0.0
      %3540 = vmatprep.subr.mxu0 0.0
      %3541 = vmatpush1.msra.mxu0 0.0
      %3542 = vmatprep.mubr.f32.mxu0 0.0
      %3543 = vmatmul.mubr.f32.gmra.mrb[0].mxu0 %v3380
      %v3544 = vpop.f32.mrb[0].mxu0
      %v3545 = vadd.f32 0.0, %v3544
      %v3546 = vpop.f32.mrb[0].mxu0
      %3547 = vmatprep.mubr.f32.mxu0 0.0
      %3548 = vmatmul.mubr.f32.gmra.mrb[0].mxu0 %v3383
      %v3549 = vpop.f32.mrb[0].mxu0
      %v3550 = vadd.f32 0.0, %v3549
      %v3551 = vpop.f32.mrb[0].mxu0
      %3552 = vmatprep.mubr.f32.mxu0 0.0
      %3553 = vmatmul.mubr.f32.gmra.mrb[0].mxu0 %v3386
      %v3554 = vpop.f32.mrb[0].mxu0
      %v3555 = vadd.f32 0.0, %v3554
      %v3556 = vpop.f32.mrb[0].mxu0
      %3557 = vmatprep.mubr.f32.mxu0 0.0
      %3558 = vmatmul.mubr.f32.gmra.mrb[0].mxu0 %v3389
      %v3559 = vpop.f32.mrb[0].mxu0
      %v3560 = vadd.f32 0.0, %v3559
      %v3561 = vpop.f32.mrb[0].mxu0
      %3562 = vmatprep.mubr.f32.mxu0 0.0
      %3563 = vmatmul.mubr.f32.gmra.mrb[0].mxu0 %v3392
      %v3564 = vpop.f32.mrb[0].mxu0
      %v3565 = vadd.f32 0.0, %v3564
      %v3566 = vpop.f32.mrb[0].mxu0
      %3567 = vmatprep.mubr.f32.mxu0 0.0
      %3568 = vmatmul.mubr.f32.gmra.mrb[0].mxu0 %v3395
      %v3569 = vpop.f32.mrb[0].mxu0
      %v3570 = vadd.f32 0.0, %v3569
      %v3571 = vpop.f32.mrb[0].mxu0
      %3572 = vmatprep.mubr.f32.mxu0 0.0
      %3573 = vmatmul.mubr.f32.gmra.mrb[0].mxu0 %v3398
      %v3574 = vpop.f32.mrb[0].mxu0
      %v3575 = vadd.f32 0.0, %v3574
      %v3576 = vpop.f32.mrb[0].mxu0
      %3577 = vmatprep.mubr.f32.mxu0 0.0
      %3578 = vmatmul.mubr.f32.gmra.mrb[0].mxu0 %v3401
      %v3579 = vpop.f32.mrb[0].mxu0
      %v3580 = vadd.f32 0.0, %v3579
      %v3581 = vpop.f32.mrb[0].mxu0
      %3582 = vmatprep.mubr.f32.mxu0 0.0
      %3583 = vmatmul.mubr.f32.gmra.mrb[0].mxu0 %v3404
      %v3584 = vpop.f32.mrb[0].mxu0
      %v3585 = vadd.f32 0.0, %v3584
      %v3586 = vpop.f32.mrb[0].mxu0
      %3587 = vmatprep.mubr.f32.mxu0 0.0
      %3588 = vmatmul.mubr.f32.gmra.mrb[0].mxu0 %v3407
      %v3589 = vpop.f32.mrb[0].mxu0
      %v3590 = vadd.f32 0.0, %v3589
      %v3591 = vpop.f32.mrb[0].mxu0
      %3592 = vmatprep.mubr.f32.mxu0 0.0
      %3593 = vmatmul.mubr.f32.gmra.mrb[0].mxu0 %v3410
      %v3594 = vpop.f32.mrb[0].mxu0
      %v3595 = vadd.f32 0.0, %v3594
      %v3596 = vpop.f32.mrb[0].mxu0
      %3597 = vmatprep.mubr.f32.mxu0 0.0
      %3598 = vmatmul.mubr.f32.gmra.mrb[0].mxu0 %v3413
      %v3599 = vpop.f32.mrb[0].mxu0
      %v3600 = vadd.f32 0.0, %v3599
      %v3601 = vpop.f32.mrb[0].mxu0
      %3602 = vmatprep.mubr.f32.mxu0 0.0
      %3603 = vmatmul.mubr.f32.gmra.mrb[0].mxu0 %v3416
      %v3604 = vpop.f32.mrb[0].mxu0
      %v3605 = vadd.f32 0.0, %v3604
      %v3606 = vpop.f32.mrb[0].mxu0
      %3607 = vmatprep.mubr.f32.mxu0 0.0
      %3608 = vmatmul.mubr.f32.gmra.mrb[0].mxu0 %v3419
      %v3609 = vpop.f32.mrb[0].mxu0
      %v3610 = vadd.f32 0.0, %v3609
      %v3611 = vpop.f32.mrb[0].mxu0
      %3612 = vmatprep.mubr.f32.mxu0 0.0
      %3613 = vmatmul.mubr.f32.gmra.mrb[0].mxu0 %v3422
      %v3614 = vpop.f32.mrb[0].mxu0
      %v3615 = vadd.f32 0.0, %v3614
      %v3616 = vpop.f32.mrb[0].mxu0
      %3617 = vmatprep.mubr.f32.mxu0 0.0
      %3618 = vmatmul.mubr.f32.gmra.mrb[0].mxu0 %v3425
      %v3619 = vpop.f32.mrb[0].mxu0
      %v3620 = vadd.f32 0.0, %v3619
      %v3621 = vpop.f32.mrb[0].mxu0
      %3622 = vmatprep.mubr.f32.mxu0 0.0
      %3623 = vmatmul.mubr.f32.gmra.mrb[0].mxu0 %v3428
      %v3624 = vpop.f32.mrb[0].mxu0
      %v3625 = vadd.f32 0.0, %v3624
      %v3626 = vpop.f32.mrb[0].mxu0
      %3627 = vmatprep.mubr.f32.mxu0 0.0
      %3628 = vmatmul.mubr.f32.gmra.mrb[0].mxu0 %v3431
      %v3629 = vpop.f32.mrb[0].mxu0
      %v3630 = vadd.f32 0.0, %v3629
      %v3631 = vpop.f32.mrb[0].mxu0
      %3632 = vmatprep.mubr.f32.mxu0 0.0
      %3633 = vmatmul.mubr.f32.gmra.mrb[0].mxu0 %v3434
      %v3634 = vpop.f32.mrb[0].mxu0
      %v3635 = vadd.f32 0.0, %v3634
      %v3636 = vpop.f32.mrb[0].mxu0
      %3637 = vmatprep.mubr.f32.mxu0 0.0
      %3638 = vmatmul.mubr.f32.gmra.mrb[0].mxu0 %v3437
      %v3639 = vpop.f32.mrb[0].mxu0
      %v3640 = vadd.f32 0.0, %v3639
      %v3641 = vpop.f32.mrb[0].mxu0
      %3642 = vmatprep.mubr.f32.mxu0 0.0
      %3643 = vmatmul.mubr.f32.gmra.mrb[0].mxu0 %v3440
      %v3644 = vpop.f32.mrb[0].mxu0
      %v3645 = vadd.f32 0.0, %v3644
      %v3646 = vpop.f32.mrb[0].mxu0
      %3647 = vmatprep.mubr.f32.mxu0 0.0
      %3648 = vmatmul.mubr.f32.gmra.mrb[0].mxu0 %v3443
      %v3649 = vpop.f32.mrb[0].mxu0
      %v3650 = vadd.f32 0.0, %v3649
      %v3651 = vpop.f32.mrb[0].mxu0
      %3652 = vmatprep.mubr.f32.mxu0 0.0
      %3653 = vmatmul.mubr.f32.gmra.mrb[0].mxu0 %v3446
      %v3654 = vpop.f32.mrb[0].mxu0
      %v3655 = vadd.f32 0.0, %v3654
      %v3656 = vpop.f32.mrb[0].mxu0
      %3657 = vmatprep.mubr.f32.mxu0 0.0
      %3658 = vmatmul.mubr.f32.gmra.mrb[0].mxu0 %v3449
      %v3659 = vpop.f32.mrb[0].mxu0
      %v3660 = vadd.f32 0.0, %v3659
      %v3661 = vpop.f32.mrb[0].mxu0
      %3662 = vmatprep.mubr.f32.mxu0 0.0
      %3663 = vmatmul.mubr.f32.gmra.mrb[0].mxu0 %v3452
      %v3664 = vpop.f32.mrb[0].mxu0
      %v3665 = vadd.f32 0.0, %v3664
      %v3666 = vpop.f32.mrb[0].mxu0
      %3667 = vmatprep.mubr.f32.mxu0 0.0
      %3668 = vmatmul.mubr.f32.gmra.mrb[0].mxu0 %v3455
      %v3669 = vpop.f32.mrb[0].mxu0
      %v3670 = vadd.f32 0.0, %v3669
      %v3671 = vpop.f32.mrb[0].mxu0
      %3672 = vmatprep.mubr.f32.mxu0 0.0
      %3673 = vmatmul.mubr.f32.gmra.mrb[0].mxu0 %v3458
      %v3674 = vpop.f32.mrb[0].mxu0
      %v3675 = vadd.f32 0.0, %v3674
      %v3676 = vpop.f32.mrb[0].mxu0
      %3677 = vmatprep.mubr.f32.mxu0 0.0
      %3678 = vmatmul.mubr.f32.gmra.mrb[0].mxu0 %v3461
      %v3679 = vpop.f32.mrb[0].mxu0
      %v3680 = vadd.f32 0.0, %v3679
      %v3681 = vpop.f32.mrb[0].mxu0
      %3682 = vmatprep.mubr.f32.mxu0 0.0
      %3683 = vmatmul.mubr.f32.gmra.mrb[0].mxu0 %v3464
      %v3684 = vpop.f32.mrb[0].mxu0
      %v3685 = vadd.f32 0.0, %v3684
      %v3686 = vpop.f32.mrb[0].mxu0
      %3687 = vmatprep.mubr.f32.mxu0 0.0
      %3688 = vmatmul.mubr.f32.gmra.mrb[0].mxu0 %v3467
      %v3689 = vpop.f32.mrb[0].mxu0
      %v3690 = vadd.f32 0.0, %v3689
      %v3691 = vpop.f32.mrb[0].mxu0
      %3692 = vmatprep.mubr.f32.mxu0 0.0
      %3693 = vmatmul.mubr.f32.gmra.mrb[0].mxu0 %v3470
      %v3694 = vpop.f32.mrb[0].mxu0
      %v3695 = vadd.f32 0.0, %v3694
      %v3696 = vpop.f32.mrb[0].mxu0
      %3697 = vmatprep.mubr.f32.mxu0 0.0
      %3698 = vmatmul.mubr.f32.gmra.mrb[0].mxu0 %v3473
      %v3699 = vpop.f32.mrb[0].mxu0
      %v3700 = vadd.f32 0.0, %v3699
      %v3701 = vpop.f32.mrb[0].mxu0
      %3702 = vdwg.mxu0
      %v3703 = vld [vmem:[%s4] sm:$0x1]
      %v3705 = vlaneseq
      %v3706 = vshrl.u32 %v3705, 7
      %v3707 = vsub.s32 0, %v3706
      %v3708 = vrot.slane %v3703, %v3707
      %v3710 = vadd.f32 %v3545, %v3708
      %v3711 = vadd.f32 %v3550, %v3708
      %v3712 = vadd.f32 %v3555, %v3708
      %v3713 = vadd.f32 %v3560, %v3708
      %v3714 = vadd.f32 %v3565, %v3708
      %v3715 = vadd.f32 %v3570, %v3708
      %v3716 = vadd.f32 %v3575, %v3708
      %v3717 = vadd.f32 %v3580, %v3708
      %v3718 = vadd.f32 %v3585, %v3708
      %v3719 = vadd.f32 %v3590, %v3708
      %v3720 = vadd.f32 %v3595, %v3708
      %v3721 = vadd.f32 %v3600, %v3708
      %v3722 = vadd.f32 %v3605, %v3708
      %v3723 = vadd.f32 %v3610, %v3708
      %v3724 = vadd.f32 %v3615, %v3708
      %v3725 = vadd.f32 %v3620, %v3708
      %v3726 = vadd.f32 %v3625, %v3708
      %v3727 = vadd.f32 %v3630, %v3708
      %v3728 = vadd.f32 %v3635, %v3708
      %v3729 = vadd.f32 %v3640, %v3708
      %v3730 = vadd.f32 %v3645, %v3708
      %v3731 = vadd.f32 %v3650, %v3708
      %v3732 = vadd.f32 %v3655, %v3708
      %v3733 = vadd.f32 %v3660, %v3708
      %v3734 = vadd.f32 %v3665, %v3708
      %v3735 = vadd.f32 %v3670, %v3708
      %v3736 = vadd.f32 %v3675, %v3708
      %v3737 = vadd.f32 %v3680, %v3708
      %v3738 = vadd.f32 %v3685, %v3708
      %v3739 = vadd.f32 %v3690, %v3708
      %v3740 = vadd.f32 %v3695, %v3708
      %v3741 = vadd.f32 %v3700, %v3708
      %v3742 = vadd.f32 %v3710, %v225
      %v3743 = vadd.f32 %v3711, %v226
      %v3744 = vadd.f32 %v3712, %v227
      %v3745 = vadd.f32 %v3713, %v228
      %v3746 = vadd.f32 %v3714, %v229
      %v3747 = vadd.f32 %v3715, %v230
      %v3748 = vadd.f32 %v3716, %v231
      %v3749 = vadd.f32 %v3717, %v232
      %v3750 = vadd.f32 %v3718, %v233
      %v3751 = vadd.f32 %v3719, %v234
      %v3752 = vadd.f32 %v3720, %v235
      %v3753 = vadd.f32 %v3721, %v236
      %v3754 = vadd.f32 %v3722, %v237
      %v3755 = vadd.f32 %v3723, %v238
      %v3756 = vadd.f32 %v3724, %v239
      %v3757 = vadd.f32 %v3725, %v240
      %v3758 = vadd.f32 %v3726, %v241
      %v3759 = vadd.f32 %v3727, %v242
      %v3760 = vadd.f32 %v3728, %v243
      %v3761 = vadd.f32 %v3729, %v244
      %v3762 = vadd.f32 %v3730, %v245
      %v3763 = vadd.f32 %v3731, %v246
      %v3764 = vadd.f32 %v3732, %v247
      %v3765 = vadd.f32 %v3733, %v248
      %v3766 = vadd.f32 %v3734, %v249
      %v3767 = vadd.f32 %v3735, %v250
      %v3768 = vadd.f32 %v3736, %v251
      %v3769 = vadd.f32 %v3737, %v252
      %v3770 = vadd.f32 %v3738, %v253
      %v3771 = vadd.f32 %v3739, %v254
      %v3772 = vadd.f32 %v3740, %v255
      %v3773 = vadd.f32 %v3741, %v256
      %3774 = vst.msk [vmem:[%s224] sm:$0xff] %vm1369, %v3742
      %3775 = vst.msk [vmem:[%s224 + $0x8] sm:$0xff] %vm1369, %v3743
      %3776 = vst.msk [vmem:[%s224 + $0x10] sm:$0xff] %vm1369, %v3744
      %3777 = vst.msk [vmem:[%s224 + $0x18] sm:$0xff] %vm1369, %v3745
      %3778 = vst.msk [vmem:[%s224 + $0x20] sm:$0xff] %vm1369, %v3746
      %3779 = vst.msk [vmem:[%s224 + $0x28] sm:$0xff] %vm1369, %v3747
      %3780 = vst.msk [vmem:[%s224 + $0x30] sm:$0xff] %vm1369, %v3748
      %3781 = vst.msk [vmem:[%s224 + $0x38] sm:$0xff] %vm1369, %v3749
      %3782 = vst.msk [vmem:[%s224 + $0x40] sm:$0xff] %vm1369, %v3750
      %3783 = vst.msk [vmem:[%s224 + $0x48] sm:$0xff] %vm1369, %v3751
      %3784 = vst.msk [vmem:[%s224 + $0x50] sm:$0xff] %vm1369, %v3752
      %3785 = vst.msk [vmem:[%s224 + $0x58] sm:$0xff] %vm1369, %v3753
      %3786 = vst.msk [vmem:[%s224 + $0x60] sm:$0xff] %vm1369, %v3754
      %3787 = vst.msk [vmem:[%s224 + $0x68] sm:$0xff] %vm1369, %v3755
      %3788 = vst.msk [vmem:[%s224 + $0x70] sm:$0xff] %vm1369, %v3756
      %3789 = vst.msk [vmem:[%s224 + $0x78] sm:$0xff] %vm1369, %v3757
      %3790 = vst.msk [vmem:[%s224 + $0x80] sm:$0xff] %vm1369, %v3758
      %3791 = vst.msk [vmem:[%s224 + $0x88] sm:$0xff] %vm1369, %v3759
      %3792 = vst.msk [vmem:[%s224 + $0x90] sm:$0xff] %vm1369, %v3760
      %3793 = vst.msk [vmem:[%s224 + $0x98] sm:$0xff] %vm1369, %v3761
      %3794 = vst.msk [vmem:[%s224 + $0xa0] sm:$0xff] %vm1369, %v3762
      %3795 = vst.msk [vmem:[%s224 + $0xa8] sm:$0xff] %vm1369, %v3763
      %3796 = vst.msk [vmem:[%s224 + $0xb0] sm:$0xff] %vm1369, %v3764
      %3797 = vst.msk [vmem:[%s224 + $0xb8] sm:$0xff] %vm1369, %v3765
      %3798 = vst.msk [vmem:[%s224 + $0xc0] sm:$0xff] %vm1369, %v3766
      %3799 = vst.msk [vmem:[%s224 + $0xc8] sm:$0xff] %vm1369, %v3767
      %3800 = vst.msk [vmem:[%s224 + $0xd0] sm:$0xff] %vm1369, %v3768
      %3801 = vst.msk [vmem:[%s224 + $0xd8] sm:$0xff] %vm1369, %v3769
      %3802 = vst.msk [vmem:[%s224 + $0xe0] sm:$0xff] %vm1369, %v3770
      %3803 = vst.msk [vmem:[%s224 + $0xe8] sm:$0xff] %vm1369, %v3771
      %3804 = vst.msk [vmem:[%s224 + $0xf0] sm:$0xff] %vm1369, %v3772
      %3805 = vst.msk [vmem:[%s224 + $0xf8] sm:$0xff] %vm1369, %v3773
      %p3806 = scmp.lt.s32.totalorder %s16, 1
      %s3807 = scalar_select %p3806, %s16, 1
      %s3808 = smul.addr %s3807, 32
      %s3809 = smul.addr %s3808, 8
      %s3810 = scalar_lea.vmem %s5, %s3809
      // Predicated region
      $region41: #{tpu_custom_call.1} parent=39 // pred_check
        %p3811 = pneg %p144
      $region42: #{tpu_custom_call.1} parent=39 // pred_check_branch
        %3813 = sbr.rel (%p3811) target = $region44
      $region43: #{tpu_custom_call.1} parent=39 // pred_region
        _
      $region44: #{tpu_custom_call.1} parent=39 // pred_fallthru
        _
    $region40: #{tpu_custom_call.1} parent=5 // pred_fallthru
      _
    %p3814 = scmp.le.s32.totalorder 2, %s11
    // Predicated region
    $region45: #{tpu_custom_call.1} parent=5 // pred_check
      %p3815 = pneg %p3814
    $region46: #{tpu_custom_call.1} parent=5 // pred_check_branch
      %3817 = sbr.rel (%p3815) target = $region48
    $region47: #{tpu_custom_call.1} parent=5 // pred_region
      %s3818 = ssub.s32 %s11, 2
      // Predicated region
      $region49: #{tpu_custom_call.1} parent=47 // pred_check
        %p3819 = pneg %p150
      $region50: #{tpu_custom_call.1} parent=47 // pred_check_branch
        %3821 = sbr.rel (%p3819) target = $region52
      $region51: #{tpu_custom_call.1} parent=47 // pred_region
        %p3822 = scmp.lt.s32.totalorder %s17, 1
        %s3823 = scalar_select %p3822, %s17, 1
        %s3824 = smul.addr %s3823, 32
        %s3825 = smul.addr %s3824, 8
        %s3826 = scalar_lea.vmem %s5, %s3825
      $region52: #{tpu_custom_call.1} parent=47 // pred_fallthru
        _
    $region48: #{tpu_custom_call.1} parent=5 // pred_fallthru
      _
  $region6: #{tpu_custom_call.1} parent=0 // loop_footer
    %s15 = sadd.s32 1, %s11
  $region7: #{tpu_custom_call.1} parent=0 // loop_footer_branch
    %10 = sbr.rel target = $region3
  $region8: #{tpu_custom_call.1} parent=0 // loop_exit
    _

</llo_original>
